<compile_context>
chip_gen: v6e
topology: v6e:2x2x1
jax: 0.10.0
libtpu: 0.0.40
codegen_flags: <defaults>
</compile_context>

<pallas_src>
import functools

import jax
import jax.numpy as jnp
import numpy as np
from jax.experimental import pallas as pl
from jax.experimental.pallas import tpu as pltpu


def _round_up(x, m):
    return -(-x // m) * m


def _depth_loss_kernel(pred_col_ref, idx_col_ref, pred_row_ref, idx_row_ref,
                       out_ref, *, chunk):
    """Processes one (ti, tj) tile of the (N, N, 3) pairwise problem.

    pred_col_ref/idx_col_ref : (ti, 3) blocks, tiled along the i (reduction) axis.
    pred_row_ref/idx_row_ref : (8, tj) blocks (xyz on sublanes 0..2, j on lanes).
    out_ref                  : (24, tj) f32 accumulator, resident across the i
                               grid axis; channel c occupies rows 8c..8c+7.
    """
    i = pl.program_id(1)               # reduction axis (last grid axis)

    @pl.when(i == 0)
    def _init():
        out_ref[...] = jnp.zeros_like(out_ref)

    ti = pred_col_ref.shape[0]
    tj = out_ref.shape[1]
    nchunks = ti // chunk

    for ch in range(3):                            # xyz channels, static unroll
        pj = pred_row_ref[ch:ch + 1, :]            # (1, tj)
        qj = idx_row_ref[ch:ch + 1, :]             # (1, tj)
        acc = jnp.zeros((8, tj), jnp.float32)      # register accumulator

        for c in range(nchunks):                   # short static chunk loop
            r0 = c * chunk
            p_blk = pred_col_ref[r0:r0 + chunk, :]   # (chunk, 3)
            q_blk = idx_col_ref[r0:r0 + chunk, :]    # (chunk, 3)
            pi = p_blk[:, ch:ch + 1]                 # (chunk, 1)
            qi = q_blk[:, ch:ch + 1]                 # (chunk, 1)

            dm = pi - pj                             # (chunk, tj) pred differences
            s = qi - qj                              # (chunk, tj) expected diffs
            r = dm - 0.2 * s
            # |sel| built directly (abs folded into the select tree):
            #   dm<0          -> |dm|        = -dm
            #   dm>=0, r<0    -> |dm-0.2 s|  = -r
            #   dm>=0, r>=0   -> max(dm-s,0) (already >= 0)
            a = jnp.where(dm < 0.0, -dm,
                          jnp.where(r < 0.0, -r, jnp.maximum(dm - s, 0.0)))
            # 0 / 0.5 / 1 "factor" as a final select (no extra multiply):
            contrib = jnp.where(s < 0.0, 0.0,
                                jnp.where(s == 0.0, 0.5 * a, a))

            # fold chunk rows down to 8 sublanes (pure elementwise VALU adds)
            folded = contrib[0:8]
            for r8 in range(8, chunk, 8):
                folded = folded + contrib[r8:r8 + 8]
            acc = acc + folded

        # single aligned, lane-dense (8, tj) RMW per channel per grid step
        out_ref[8 * ch:8 * ch + 8, :] += acc


def depth_loss_3d(predictions, spacings, shape, step, *, ti=256, tj=1024):
    """predictions: (N, 3) float32; spacings: list of 3 arrays of shape (1,)
    (batch=1, as the module's broadcasting effectively requires); shape=(h,w,d)."""
    h, w, d = shape
    n = h * w * d

    # new_spacing: stack -> (3, B), permute -> (B, 3); take batch 0 -> (3,)
    new_spacing = jnp.transpose(jnp.stack(spacings), (1, 0))[0].astype(jnp.float32)

    ii, jj, kk = jnp.unravel_index(jnp.arange(n), (h, w, d))
    index_tensor = jnp.stack([ii, jj, kk], axis=1).astype(jnp.float32)   # (n, 3)
    index_tensor = index_tensor * new_spacing[None, :] * jnp.float32(step)

    pred = predictions.reshape(n, 3).astype(jnp.float32)

    # ---- tile sizes -------------------------------------------------------
    ti = _round_up(max(8, min(ti, _round_up(n, 8))), 8)
    chunk = 32 if ti % 32 == 0 else (16 if ti % 16 == 0 else 8)

    tj = _round_up(max(128, min(tj, _round_up(n, 128))), 128)
    # Megacore (v7x): prefer >= 2 j-tiles whenever the problem is big enough.
    if _round_up(n, 128) >= 256 and _round_up(n, tj) // tj < 2:
        tj = _round_up(_round_up(n, 128) // 2, 128)

    n_pad_i = _round_up(n, ti)
    n_pad_j = _round_up(n, tj)

    # ---- padded operand layouts ------------------------------------------
    # i-axis ("column") layout, (Npad_i, 3).  Padded index rows get a
    # data-derived negative sentinel so steps = qi - qj < 0 there, which the
    # select tree maps to exactly 0 contribution (no reliance on +-1e9).
    sentinel = jnp.max(jnp.abs(index_tensor)) + 1.0
    pred_col = jnp.pad(pred, ((0, n_pad_i - n), (0, 0)))
    idx_col = jnp.concatenate(
        [index_tensor,
         jnp.broadcast_to(-sentinel, (n_pad_i - n, 3)).astype(jnp.float32)],
        axis=0)

    # j-axis ("row") layout, (8, Npad_j): xyz on sublanes 0..2 (3->8 padded),
    # j on lanes.  Padded j columns need no sentinel: their output columns are
    # sliced off before the final host-side sum.
    pred_row = jnp.pad(pred.T, ((0, 5), (0, n_pad_j - n)))
    idx_row = jnp.pad(index_tensor.T, ((0, 5), (0, n_pad_j - n)))

    grid = (n_pad_j // tj, n_pad_i // ti)   # j (parallel) outer, i (reduction) last
    n_j_tiles = grid[0]

    kernel = functools.partial(_depth_loss_kernel, chunk=chunk)

    cost = pl.CostEstimate(
        flops=int(3 * 20) * int(n_pad_i) * int(n_pad_j),
        transcendentals=0,
        bytes_accessed=int(4 * (2 * 3 * n_pad_i * n_j_tiles   # column blocks, re-read per j tile
                                + 2 * 8 * n_pad_j             # row inputs, read once
                                + 24 * n_pad_j)),              # output accumulator writeback
    )

    partial_sums = pl.pallas_call(
        kernel,
        out_shape=jax.ShapeDtypeStruct((24, n_pad_j), jnp.float32),
        grid=grid,
        in_specs=[
            pl.BlockSpec((ti, 3), lambda j, i: (i, 0)),    # pred_col (tiled along i)
            pl.BlockSpec((ti, 3), lambda j, i: (i, 0)),    # idx_col  (tiled along i)
            pl.BlockSpec((8, tj), lambda j, i: (0, j)),    # pred_row
            pl.BlockSpec((8, tj), lambda j, i: (0, j)),    # idx_row
        ],
        out_specs=pl.BlockSpec((24, tj), lambda j, i: (0, j)),
        compiler_params=pltpu.CompilerParams(
            dimension_semantics=("parallel", "arbitrary"),
            vmem_limit_bytes=32 * 1024 * 1024,
        ),
        cost_estimate=cost,
    )(pred_col, idx_col, pred_row, idx_row)

    # Tiny O(N) fold + normalisation: JAX glue.  Drop padded j columns, sum the
    # 8 per-sublane partial rows of each channel, normalise by N^2.
    valid = partial_sums[:, :n].reshape(3, 8, n)
    losses = valid.sum(axis=(1, 2)) / float(n) ** 2
    return [losses[0], losses[1], losses[2]]


def _reference(predictions, spacings, shape, step):
    """Pure-JAX transcription of DepthLoss3D.forward (batch=1)."""
    h, w, d = shape
    n = h * w * d
    new_spacing = jnp.transpose(jnp.stack(spacings), (1, 0))[None]       # (1, 1, 3)
    ii, jj, kk = jnp.unravel_index(jnp.arange(n), (h, w, d))
    index_tensor = jnp.stack([ii, jj, kk], axis=1).astype(jnp.float32)   # (n, 3)
    index_tensor = index_tensor * new_spacing * step                     # (1, n, 3)

    pred = predictions.astype(jnp.float32)
    dm = pred.reshape(-1, 1, 3) - pred.reshape(1, -1, 3)                 # (n, n, 3)
    s = index_tensor.reshape(-1, 1, 3) - index_tensor.reshape(1, -1, 3)  # (n, n, 3)

    dm = jnp.where(dm >= 0, dm - 0.2 * s, dm)
    dm = jnp.where(dm >= 0, jnp.maximum(dm - 0.8 * s, 0.0), dm)
    dm = jnp.where(s < 0, 0.0, dm)
    dm = jnp.where(s == 0, 0.5 * dm, dm)
    return [jnp.abs(dm[:, :, i]).sum() / dm.shape[0] ** 2 for i in range(3)]


if __name__ == "__main__":
    key = jax.random.PRNGKey(0)
    h, w, d = 6, 5, 7          # small volume -> N = 210 voxels
    n = h * w * d
    step = 1.5

    predictions = jax.random.normal(key, (n, 3), dtype=jnp.float32) * 5.0
    spacings = [jnp.array([1.0], dtype=jnp.float32),
                jnp.array([0.75], dtype=jnp.float32),
                jnp.array([2.5], dtype=jnp.float32)]

    # Small tiles in the demo so the 2-D grid / chunk-loop / padding /
    # accumulation paths (multiple i- and j-tiles) are actually exercised.
    losses = depth_loss_3d(predictions, spacings, (h, w, d), step, ti=64, tj=128)
    losses = [jax.block_until_ready(l) for l in losses]

    ref = _reference(predictions, spacings, (h, w, d), step)
    for got, want in zip(losses, ref):
        np.testing.assert_allclose(np.asarray(got), np.asarray(want),
                                   rtol=2e-4, atol=1e-5)

    print("KERNEL_OK")
</pallas_src>

<mosaic_0001>
module attributes {stable_mosaic.version = 11 : i64} {
  func.func @_depth_loss_kernel(%arg0: i32, %arg1: i32, %arg2: memref<64x3xf32, #tpu.memory_space<vmem>>, %arg3: memref<64x3xf32, #tpu.memory_space<vmem>>, %arg4: memref<8x128xf32, #tpu.memory_space<vmem>>, %arg5: memref<8x128xf32, #tpu.memory_space<vmem>>, %arg6: memref<24x128xf32, #tpu.memory_space<vmem>>) attributes {dimension_semantics = [#tpu.dimension_semantics<parallel>, #tpu.dimension_semantics<arbitrary>], iteration_bounds = array<i64: 2, 4>, scalar_prefetch = 0 : i64, scratch_operands = 0 : i64, tpu.core_type = #tpu.core_type<tc>, window_params = [{transform_indices = @transform_0, window_bounds = array<i64: 64, 3>}, {transform_indices = @transform_1, window_bounds = array<i64: 64, 3>}, {transform_indices = @transform_2, window_bounds = array<i64: 8, 128>}, {transform_indices = @transform_3, window_bounds = array<i64: 8, 128>}, {transform_indices = @transform_4, window_bounds = array<i64: 24, 128>}]} {
    %c0_i32 = arith.constant 0 : i32
    %0 = arith.cmpi eq, %arg1, %c0_i32 : i32
    %1 = arith.extui %0 : i1 to i32
    %c0_i32_0 = arith.constant 0 : i32
    %2 = arith.cmpi ne, %1, %c0_i32_0 : i32
    scf.if %2 {
      %cst_105 = arith.constant 0.000000e+00 : f32
      %279 = vector.broadcast %cst_105 : f32 to vector<24x128xf32>
      %c0_106 = arith.constant 0 : index
      %c0_107 = arith.constant 0 : index
      %280 = vector.load %arg6[%c0_106, %c0_107] : memref<24x128xf32, #tpu.memory_space<vmem>>, vector<24x128xf32>
      tpu.vector_store %arg6[%c0_106, %c0_107], %279 {strides = array<i32>} : memref<24x128xf32, #tpu.memory_space<vmem>>, vector<24x128xf32>,
    } else {
    }
    %c0 = arith.constant 0 : index
    %c0_1 = arith.constant 0 : index
    %3 = vector.load %arg4[%c0, %c0_1] : memref<8x128xf32, #tpu.memory_space<vmem>>, vector<1x128xf32>
    %c0_2 = arith.constant 0 : index
    %c0_3 = arith.constant 0 : index
    %4 = vector.load %arg5[%c0_2, %c0_3] : memref<8x128xf32, #tpu.memory_space<vmem>>, vector<1x128xf32>
    %cst = arith.constant 0.000000e+00 : f32
    %5 = vector.broadcast %cst : f32 to vector<8x128xf32>
    %c0_4 = arith.constant 0 : index
    %c0_5 = arith.constant 0 : index
    %6 = vector.load %arg2[%c0_4, %c0_5] : memref<64x3xf32, #tpu.memory_space<vmem>>, vector<32x3xf32>
    %c0_6 = arith.constant 0 : index
    %c0_7 = arith.constant 0 : index
    %7 = vector.load %arg3[%c0_6, %c0_7] : memref<64x3xf32, #tpu.memory_space<vmem>>, vector<32x3xf32>
    %8 = vector.extract_strided_slice %6 {offsets = [0, 0], sizes = [32, 1], strides = [1, 1]} : vector<32x3xf32> to vector<32x1xf32>
    %9 = vector.extract_strided_slice %7 {offsets = [0, 0], sizes = [32, 1], strides = [1, 1]} : vector<32x3xf32> to vector<32x1xf32>
    %10 = vector.broadcast %8 : vector<32x1xf32> to vector<32x128xf32>
    %11 = vector.broadcast %3 : vector<1x128xf32> to vector<32x128xf32>
    %12 = arith.subf %10, %11 : vector<32x128xf32>
    %13 = vector.broadcast %9 : vector<32x1xf32> to vector<32x128xf32>
    %14 = vector.broadcast %4 : vector<1x128xf32> to vector<32x128xf32>
    %15 = arith.subf %13, %14 : vector<32x128xf32>
    %cst_8 = arith.constant 2.000000e-01 : f32
    %16 = vector.broadcast %cst_8 : f32 to vector<32x128xf32>
    %17 = arith.mulf %16, %15 : vector<32x128xf32>
    %18 = arith.subf %12, %17 : vector<32x128xf32>
    %cst_9 = arith.constant 0.000000e+00 : f32
    %19 = vector.broadcast %cst_9 : f32 to vector<32x128xf32>
    %20 = arith.cmpf olt, %12, %19 : vector<32x128xf32>
    %cst_10 = arith.constant 0.000000e+00 : f32
    %21 = vector.broadcast %cst_10 : f32 to vector<32x128xf32>
    %22 = arith.subf %21, %12 : vector<32x128xf32>
    %cst_11 = arith.constant 0.000000e+00 : f32
    %23 = vector.broadcast %cst_11 : f32 to vector<32x128xf32>
    %24 = arith.cmpf olt, %18, %23 : vector<32x128xf32>
    %cst_12 = arith.constant 0.000000e+00 : f32
    %25 = vector.broadcast %cst_12 : f32 to vector<32x128xf32>
    %26 = arith.subf %25, %18 : vector<32x128xf32>
    %27 = arith.subf %12, %15 : vector<32x128xf32>
    %cst_13 = arith.constant 0.000000e+00 : f32
    %28 = vector.broadcast %cst_13 : f32 to vector<32x128xf32>
    %29 = arith.maximumf %27, %28 : vector<32x128xf32>
    %30 = arith.select %24, %26, %29 : vector<32x128xi1>, vector<32x128xf32>
    %31 = arith.select %20, %22, %30 : vector<32x128xi1>, vector<32x128xf32>
    %cst_14 = arith.constant 0.000000e+00 : f32
    %32 = vector.broadcast %cst_14 : f32 to vector<32x128xf32>
    %33 = arith.cmpf olt, %15, %32 : vector<32x128xf32>
    %cst_15 = arith.constant 0.000000e+00 : f32
    %34 = vector.broadcast %cst_15 : f32 to vector<32x128xf32>
    %35 = arith.cmpf oeq, %15, %34 : vector<32x128xf32>
    %cst_16 = arith.constant 5.000000e-01 : f32
    %36 = vector.broadcast %cst_16 : f32 to vector<32x128xf32>
    %37 = arith.mulf %36, %31 : vector<32x128xf32>
    %38 = arith.select %35, %37, %31 : vector<32x128xi1>, vector<32x128xf32>
    %cst_17 = arith.constant 0.000000e+00 : f32
    %39 = vector.broadcast %cst_17 : f32 to vector<32x128xf32>
    %40 = arith.select %33, %39, %38 : vector<32x128xi1>, vector<32x128xf32>
    %41 = vector.extract_strided_slice %40 {offsets = [0, 0], sizes = [8, 128], strides = [1, 1]} : vector<32x128xf32> to vector<8x128xf32>
    %42 = vector.extract_strided_slice %40 {offsets = [8, 0], sizes = [8, 128], strides = [1, 1]} : vector<32x128xf32> to vector<8x128xf32>
    %43 = arith.addf %41, %42 : vector<8x128xf32>
    %44 = vector.extract_strided_slice %40 {offsets = [16, 0], sizes = [8, 128], strides = [1, 1]} : vector<32x128xf32> to vector<8x128xf32>
    %45 = arith.addf %43, %44 : vector<8x128xf32>
    %46 = vector.extract_strided_slice %40 {offsets = [24, 0], sizes = [8, 128], strides = [1, 1]} : vector<32x128xf32> to vector<8x128xf32>
    %47 = arith.addf %45, %46 : vector<8x128xf32>
    %48 = arith.addf %5, %47 : vector<8x128xf32>
    %c32 = arith.constant 32 : index
    %c0_18 = arith.constant 0 : index
    %49 = vector.load %arg2[%c32, %c0_18] : memref<64x3xf32, #tpu.memory_space<vmem>>, vector<32x3xf32>
    %c32_19 = arith.constant 32 : index
    %c0_20 = arith.constant 0 : index
    %50 = vector.load %arg3[%c32_19, %c0_20] : memref<64x3xf32, #tpu.memory_space<vmem>>, vector<32x3xf32>
    %51 = vector.extract_strided_slice %49 {offsets = [0, 0], sizes = [32, 1], strides = [1, 1]} : vector<32x3xf32> to vector<32x1xf32>
    %52 = vector.extract_strided_slice %50 {offsets = [0, 0], sizes = [32, 1], strides = [1, 1]} : vector<32x3xf32> to vector<32x1xf32>
    %53 = vector.broadcast %51 : vector<32x1xf32> to vector<32x128xf32>
    %54 = vector.broadcast %3 : vector<1x128xf32> to vector<32x128xf32>
    %55 = arith.subf %53, %54 : vector<32x128xf32>
    %56 = vector.broadcast %52 : vector<32x1xf32> to vector<32x128xf32>
    %57 = vector.broadcast %4 : vector<1x128xf32> to vector<32x128xf32>
    %58 = arith.subf %56, %57 : vector<32x128xf32>
    %cst_21 = arith.constant 2.000000e-01 : f32
    %59 = vector.broadcast %cst_21 : f32 to vector<32x128xf32>
    %60 = arith.mulf %59, %58 : vector<32x128xf32>
    %61 = arith.subf %55, %60 : vector<32x128xf32>
    %cst_22 = arith.constant 0.000000e+00 : f32
    %62 = vector.broadcast %cst_22 : f32 to vector<32x128xf32>
    %63 = arith.cmpf olt, %55, %62 : vector<32x128xf32>
    %cst_23 = arith.constant 0.000000e+00 : f32
    %64 = vector.broadcast %cst_23 : f32 to vector<32x128xf32>
    %65 = arith.subf %64, %55 : vector<32x128xf32>
    %cst_24 = arith.constant 0.000000e+00 : f32
    %66 = vector.broadcast %cst_24 : f32 to vector<32x128xf32>
    %67 = arith.cmpf olt, %61, %66 : vector<32x128xf32>
    %cst_25 = arith.constant 0.000000e+00 : f32
    %68 = vector.broadcast %cst_25 : f32 to vector<32x128xf32>
    %69 = arith.subf %68, %61 : vector<32x128xf32>
    %70 = arith.subf %55, %58 : vector<32x128xf32>
    %cst_26 = arith.constant 0.000000e+00 : f32
    %71 = vector.broadcast %cst_26 : f32 to vector<32x128xf32>
    %72 = arith.maximumf %70, %71 : vector<32x128xf32>
    %73 = arith.select %67, %69, %72 : vector<32x128xi1>, vector<32x128xf32>
    %74 = arith.select %63, %65, %73 : vector<32x128xi1>, vector<32x128xf32>
    %cst_27 = arith.constant 0.000000e+00 : f32
    %75 = vector.broadcast %cst_27 : f32 to vector<32x128xf32>
    %76 = arith.cmpf olt, %58, %75 : vector<32x128xf32>
    %cst_28 = arith.constant 0.000000e+00 : f32
    %77 = vector.broadcast %cst_28 : f32 to vector<32x128xf32>
    %78 = arith.cmpf oeq, %58, %77 : vector<32x128xf32>
    %cst_29 = arith.constant 5.000000e-01 : f32
    %79 = vector.broadcast %cst_29 : f32 to vector<32x128xf32>
    %80 = arith.mulf %79, %74 : vector<32x128xf32>
    %81 = arith.select %78, %80, %74 : vector<32x128xi1>, vector<32x128xf32>
    %cst_30 = arith.constant 0.000000e+00 : f32
    %82 = vector.broadcast %cst_30 : f32 to vector<32x128xf32>
    %83 = arith.select %76, %82, %81 : vector<32x128xi1>, vector<32x128xf32>
    %84 = vector.extract_strided_slice %83 {offsets = [0, 0], sizes = [8, 128], strides = [1, 1]} : vector<32x128xf32> to vector<8x128xf32>
    %85 = vector.extract_strided_slice %83 {offsets = [8, 0], sizes = [8, 128], strides = [1, 1]} : vector<32x128xf32> to vector<8x128xf32>
    %86 = arith.addf %84, %85 : vector<8x128xf32>
    %87 = vector.extract_strided_slice %83 {offsets = [16, 0], sizes = [8, 128], strides = [1, 1]} : vector<32x128xf32> to vector<8x128xf32>
    %88 = arith.addf %86, %87 : vector<8x128xf32>
    %89 = vector.extract_strided_slice %83 {offsets = [24, 0], sizes = [8, 128], strides = [1, 1]} : vector<32x128xf32> to vector<8x128xf32>
    %90 = arith.addf %88, %89 : vector<8x128xf32>
    %91 = arith.addf %48, %90 : vector<8x128xf32>
    %c0_31 = arith.constant 0 : index
    %c0_32 = arith.constant 0 : index
    %92 = vector.load %arg6[%c0_31, %c0_32] : memref<24x128xf32, #tpu.memory_space<vmem>>, vector<8x128xf32>
    %93 = arith.addf %92, %91 : vector<8x128xf32>
    %c0_33 = arith.constant 0 : index
    %c0_34 = arith.constant 0 : index
    %94 = vector.load %arg6[%c0_33, %c0_34] : memref<24x128xf32, #tpu.memory_space<vmem>>, vector<8x128xf32>
    tpu.vector_store %arg6[%c0_33, %c0_34], %93 {strides = array<i32>} : memref<24x128xf32, #tpu.memory_space<vmem>>, vector<8x128xf32>,
    %c1 = arith.constant 1 : index
    %c0_35 = arith.constant 0 : index
    %95 = vector.load %arg4[%c1, %c0_35] : memref<8x128xf32, #tpu.memory_space<vmem>>, vector<1x128xf32>
    %c1_36 = arith.constant 1 : index
    %c0_37 = arith.constant 0 : index
    %96 = vector.load %arg5[%c1_36, %c0_37] : memref<8x128xf32, #tpu.memory_space<vmem>>, vector<1x128xf32>
    %cst_38 = arith.constant 0.000000e+00 : f32
    %97 = vector.broadcast %cst_38 : f32 to vector<8x128xf32>
    %c0_39 = arith.constant 0 : index
    %c0_40 = arith.constant 0 : index
    %98 = vector.load %arg2[%c0_39, %c0_40] : memref<64x3xf32, #tpu.memory_space<vmem>>, vector<32x3xf32>
    %c0_41 = arith.constant 0 : index
    %c0_42 = arith.constant 0 : index
    %99 = vector.load %arg3[%c0_41, %c0_42] : memref<64x3xf32, #tpu.memory_space<vmem>>, vector<32x3xf32>
    %100 = vector.extract_strided_slice %98 {offsets = [0, 1], sizes = [32, 1], strides = [1, 1]} : vector<32x3xf32> to vector<32x1xf32>
    %101 = vector.extract_strided_slice %99 {offsets = [0, 1], sizes = [32, 1], strides = [1, 1]} : vector<32x3xf32> to vector<32x1xf32>
    %102 = vector.broadcast %100 : vector<32x1xf32> to vector<32x128xf32>
    %103 = vector.broadcast %95 : vector<1x128xf32> to vector<32x128xf32>
    %104 = arith.subf %102, %103 : vector<32x128xf32>
    %105 = vector.broadcast %101 : vector<32x1xf32> to vector<32x128xf32>
    %106 = vector.broadcast %96 : vector<1x128xf32> to vector<32x128xf32>
    %107 = arith.subf %105, %106 : vector<32x128xf32>
    %cst_43 = arith.constant 2.000000e-01 : f32
    %108 = vector.broadcast %cst_43 : f32 to vector<32x128xf32>
    %109 = arith.mulf %108, %107 : vector<32x128xf32>
    %110 = arith.subf %104, %109 : vector<32x128xf32>
    %cst_44 = arith.constant 0.000000e+00 : f32
    %111 = vector.broadcast %cst_44 : f32 to vector<32x128xf32>
    %112 = arith.cmpf olt, %104, %111 : vector<32x128xf32>
    %cst_45 = arith.constant 0.000000e+00 : f32
    %113 = vector.broadcast %cst_45 : f32 to vector<32x128xf32>
    %114 = arith.subf %113, %104 : vector<32x128xf32>
    %cst_46 = arith.constant 0.000000e+00 : f32
    %115 = vector.broadcast %cst_46 : f32 to vector<32x128xf32>
    %116 = arith.cmpf olt, %110, %115 : vector<32x128xf32>
    %cst_47 = arith.constant 0.000000e+00 : f32
    %117 = vector.broadcast %cst_47 : f32 to vector<32x128xf32>
    %118 = arith.subf %117, %110 : vector<32x128xf32>
    %119 = arith.subf %104, %107 : vector<32x128xf32>
    %cst_48 = arith.constant 0.000000e+00 : f32
    %120 = vector.broadcast %cst_48 : f32 to vector<32x128xf32>
    %121 = arith.maximumf %119, %120 : vector<32x128xf32>
    %122 = arith.select %116, %118, %121 : vector<32x128xi1>, vector<32x128xf32>
    %123 = arith.select %112, %114, %122 : vector<32x128xi1>, vector<32x128xf32>
    %cst_49 = arith.constant 0.000000e+00 : f32
    %124 = vector.broadcast %cst_49 : f32 to vector<32x128xf32>
    %125 = arith.cmpf olt, %107, %124 : vector<32x128xf32>
    %cst_50 = arith.constant 0.000000e+00 : f32
    %126 = vector.broadcast %cst_50 : f32 to vector<32x128xf32>
    %127 = arith.cmpf oeq, %107, %126 : vector<32x128xf32>
    %cst_51 = arith.constant 5.000000e-01 : f32
    %128 = vector.broadcast %cst_51 : f32 to vector<32x128xf32>
    %129 = arith.mulf %128, %123 : vector<32x128xf32>
    %130 = arith.select %127, %129, %123 : vector<32x128xi1>, vector<32x128xf32>
    %cst_52 = arith.constant 0.000000e+00 : f32
    %131 = vector.broadcast %cst_52 : f32 to vector<32x128xf32>
    %132 = arith.select %125, %131, %130 : vector<32x128xi1>, vector<32x128xf32>
    %133 = vector.extract_strided_slice %132 {offsets = [0, 0], sizes = [8, 128], strides = [1, 1]} : vector<32x128xf32> to vector<8x128xf32>
    %134 = vector.extract_strided_slice %132 {offsets = [8, 0], sizes = [8, 128], strides = [1, 1]} : vector<32x128xf32> to vector<8x128xf32>
    %135 = arith.addf %133, %134 : vector<8x128xf32>
    %136 = vector.extract_strided_slice %132 {offsets = [16, 0], sizes = [8, 128], strides = [1, 1]} : vector<32x128xf32> to vector<8x128xf32>
    %137 = arith.addf %135, %136 : vector<8x128xf32>
    %138 = vector.extract_strided_slice %132 {offsets = [24, 0], sizes = [8, 128], strides = [1, 1]} : vector<32x128xf32> to vector<8x128xf32>
    %139 = arith.addf %137, %138 : vector<8x128xf32>
    %140 = arith.addf %97, %139 : vector<8x128xf32>
    %c32_53 = arith.constant 32 : index
    %c0_54 = arith.constant 0 : index
    %141 = vector.load %arg2[%c32_53, %c0_54] : memref<64x3xf32, #tpu.memory_space<vmem>>, vector<32x3xf32>
    %c32_55 = arith.constant 32 : index
    %c0_56 = arith.constant 0 : index
    %142 = vector.load %arg3[%c32_55, %c0_56] : memref<64x3xf32, #tpu.memory_space<vmem>>, vector<32x3xf32>
    %143 = vector.extract_strided_slice %141 {offsets = [0, 1], sizes = [32, 1], strides = [1, 1]} : vector<32x3xf32> to vector<32x1xf32>
    %144 = vector.extract_strided_slice %142 {offsets = [0, 1], sizes = [32, 1], strides = [1, 1]} : vector<32x3xf32> to vector<32x1xf32>
    %145 = vector.broadcast %143 : vector<32x1xf32> to vector<32x128xf32>
    %146 = vector.broadcast %95 : vector<1x128xf32> to vector<32x128xf32>
    %147 = arith.subf %145, %146 : vector<32x128xf32>
    %148 = vector.broadcast %144 : vector<32x1xf32> to vector<32x128xf32>
    %149 = vector.broadcast %96 : vector<1x128xf32> to vector<32x128xf32>
    %150 = arith.subf %148, %149 : vector<32x128xf32>
    %cst_57 = arith.constant 2.000000e-01 : f32
    %151 = vector.broadcast %cst_57 : f32 to vector<32x128xf32>
    %152 = arith.mulf %151, %150 : vector<32x128xf32>
    %153 = arith.subf %147, %152 : vector<32x128xf32>
    %cst_58 = arith.constant 0.000000e+00 : f32
    %154 = vector.broadcast %cst_58 : f32 to vector<32x128xf32>
    %155 = arith.cmpf olt, %147, %154 : vector<32x128xf32>
    %cst_59 = arith.constant 0.000000e+00 : f32
    %156 = vector.broadcast %cst_59 : f32 to vector<32x128xf32>
    %157 = arith.subf %156, %147 : vector<32x128xf32>
    %cst_60 = arith.constant 0.000000e+00 : f32
    %158 = vector.broadcast %cst_60 : f32 to vector<32x128xf32>
    %159 = arith.cmpf olt, %153, %158 : vector<32x128xf32>
    %cst_61 = arith.constant 0.000000e+00 : f32
    %160 = vector.broadcast %cst_61 : f32 to vector<32x128xf32>
    %161 = arith.subf %160, %153 : vector<32x128xf32>
    %162 = arith.subf %147, %150 : vector<32x128xf32>
    %cst_62 = arith.constant 0.000000e+00 : f32
    %163 = vector.broadcast %cst_62 : f32 to vector<32x128xf32>
    %164 = arith.maximumf %162, %163 : vector<32x128xf32>
    %165 = arith.select %159, %161, %164 : vector<32x128xi1>, vector<32x128xf32>
    %166 = arith.select %155, %157, %165 : vector<32x128xi1>, vector<32x128xf32>
    %cst_63 = arith.constant 0.000000e+00 : f32
    %167 = vector.broadcast %cst_63 : f32 to vector<32x128xf32>
    %168 = arith.cmpf olt, %150, %167 : vector<32x128xf32>
    %cst_64 = arith.constant 0.000000e+00 : f32
    %169 = vector.broadcast %cst_64 : f32 to vector<32x128xf32>
    %170 = arith.cmpf oeq, %150, %169 : vector<32x128xf32>
    %cst_65 = arith.constant 5.000000e-01 : f32
    %171 = vector.broadcast %cst_65 : f32 to vector<32x128xf32>
    %172 = arith.mulf %171, %166 : vector<32x128xf32>
    %173 = arith.select %170, %172, %166 : vector<32x128xi1>, vector<32x128xf32>
    %cst_66 = arith.constant 0.000000e+00 : f32
    %174 = vector.broadcast %cst_66 : f32 to vector<32x128xf32>
    %175 = arith.select %168, %174, %173 : vector<32x128xi1>, vector<32x128xf32>
    %176 = vector.extract_strided_slice %175 {offsets = [0, 0], sizes = [8, 128], strides = [1, 1]} : vector<32x128xf32> to vector<8x128xf32>
    %177 = vector.extract_strided_slice %175 {offsets = [8, 0], sizes = [8, 128], strides = [1, 1]} : vector<32x128xf32> to vector<8x128xf32>
    %178 = arith.addf %176, %177 : vector<8x128xf32>
    %179 = vector.extract_strided_slice %175 {offsets = [16, 0], sizes = [8, 128], strides = [1, 1]} : vector<32x128xf32> to vector<8x128xf32>
    %180 = arith.addf %178, %179 : vector<8x128xf32>
    %181 = vector.extract_strided_slice %175 {offsets = [24, 0], sizes = [8, 128], strides = [1, 1]} : vector<32x128xf32> to vector<8x128xf32>
    %182 = arith.addf %180, %181 : vector<8x128xf32>
    %183 = arith.addf %140, %182 : vector<8x128xf32>
    %c8 = arith.constant 8 : index
    %c0_67 = arith.constant 0 : index
    %184 = vector.load %arg6[%c8, %c0_67] : memref<24x128xf32, #tpu.memory_space<vmem>>, vector<8x128xf32>
    %185 = arith.addf %184, %183 : vector<8x128xf32>
    %c8_68 = arith.constant 8 : index
    %c0_69 = arith.constant 0 : index
    %186 = vector.load %arg6[%c8_68, %c0_69] : memref<24x128xf32, #tpu.memory_space<vmem>>, vector<8x128xf32>
    tpu.vector_store %arg6[%c8_68, %c0_69], %185 {strides = array<i32>} : memref<24x128xf32, #tpu.memory_space<vmem>>, vector<8x128xf32>,
    %c2 = arith.constant 2 : index
    %c0_70 = arith.constant 0 : index
    %187 = vector.load %arg4[%c2, %c0_70] : memref<8x128xf32, #tpu.memory_space<vmem>>, vector<1x128xf32>
    %c2_71 = arith.constant 2 : index
    %c0_72 = arith.constant 0 : index
    %188 = vector.load %arg5[%c2_71, %c0_72] : memref<8x128xf32, #tpu.memory_space<vmem>>, vector<1x128xf32>
    %cst_73 = arith.constant 0.000000e+00 : f32
    %189 = vector.broadcast %cst_73 : f32 to vector<8x128xf32>
    %c0_74 = arith.constant 0 : index
    %c0_75 = arith.constant 0 : index
    %190 = vector.load %arg2[%c0_74, %c0_75] : memref<64x3xf32, #tpu.memory_space<vmem>>, vector<32x3xf32>
    %c0_76 = arith.constant 0 : index
    %c0_77 = arith.constant 0 : index
    %191 = vector.load %arg3[%c0_76, %c0_77] : memref<64x3xf32, #tpu.memory_space<vmem>>, vector<32x3xf32>
    %192 = vector.extract_strided_slice %190 {offsets = [0, 2], sizes = [32, 1], strides = [1, 1]} : vector<32x3xf32> to vector<32x1xf32>
    %193 = vector.extract_strided_slice %191 {offsets = [0, 2], sizes = [32, 1], strides = [1, 1]} : vector<32x3xf32> to vector<32x1xf32>
    %194 = vector.broadcast %192 : vector<32x1xf32> to vector<32x128xf32>
    %195 = vector.broadcast %187 : vector<1x128xf32> to vector<32x128xf32>
    %196 = arith.subf %194, %195 : vector<32x128xf32>
    %197 = vector.broadcast %193 : vector<32x1xf32> to vector<32x128xf32>
    %198 = vector.broadcast %188 : vector<1x128xf32> to vector<32x128xf32>
    %199 = arith.subf %197, %198 : vector<32x128xf32>
    %cst_78 = arith.constant 2.000000e-01 : f32
    %200 = vector.broadcast %cst_78 : f32 to vector<32x128xf32>
    %201 = arith.mulf %200, %199 : vector<32x128xf32>
    %202 = arith.subf %196, %201 : vector<32x128xf32>
    %cst_79 = arith.constant 0.000000e+00 : f32
    %203 = vector.broadcast %cst_79 : f32 to vector<32x128xf32>
    %204 = arith.cmpf olt, %196, %203 : vector<32x128xf32>
    %cst_80 = arith.constant 0.000000e+00 : f32
    %205 = vector.broadcast %cst_80 : f32 to vector<32x128xf32>
    %206 = arith.subf %205, %196 : vector<32x128xf32>
    %cst_81 = arith.constant 0.000000e+00 : f32
    %207 = vector.broadcast %cst_81 : f32 to vector<32x128xf32>
    %208 = arith.cmpf olt, %202, %207 : vector<32x128xf32>
    %cst_82 = arith.constant 0.000000e+00 : f32
    %209 = vector.broadcast %cst_82 : f32 to vector<32x128xf32>
    %210 = arith.subf %209, %202 : vector<32x128xf32>
    %211 = arith.subf %196, %199 : vector<32x128xf32>
    %cst_83 = arith.constant 0.000000e+00 : f32
    %212 = vector.broadcast %cst_83 : f32 to vector<32x128xf32>
    %213 = arith.maximumf %211, %212 : vector<32x128xf32>
    %214 = arith.select %208, %210, %213 : vector<32x128xi1>, vector<32x128xf32>
    %215 = arith.select %204, %206, %214 : vector<32x128xi1>, vector<32x128xf32>
    %cst_84 = arith.constant 0.000000e+00 : f32
    %216 = vector.broadcast %cst_84 : f32 to vector<32x128xf32>
    %217 = arith.cmpf olt, %199, %216 : vector<32x128xf32>
    %cst_85 = arith.constant 0.000000e+00 : f32
    %218 = vector.broadcast %cst_85 : f32 to vector<32x128xf32>
    %219 = arith.cmpf oeq, %199, %218 : vector<32x128xf32>
    %cst_86 = arith.constant 5.000000e-01 : f32
    %220 = vector.broadcast %cst_86 : f32 to vector<32x128xf32>
    %221 = arith.mulf %220, %215 : vector<32x128xf32>
    %222 = arith.select %219, %221, %215 : vector<32x128xi1>, vector<32x128xf32>
    %cst_87 = arith.constant 0.000000e+00 : f32
    %223 = vector.broadcast %cst_87 : f32 to vector<32x128xf32>
    %224 = arith.select %217, %223, %222 : vector<32x128xi1>, vector<32x128xf32>
    %225 = vector.extract_strided_slice %224 {offsets = [0, 0], sizes = [8, 128], strides = [1, 1]} : vector<32x128xf32> to vector<8x128xf32>
    %226 = vector.extract_strided_slice %224 {offsets = [8, 0], sizes = [8, 128], strides = [1, 1]} : vector<32x128xf32> to vector<8x128xf32>
    %227 = arith.addf %225, %226 : vector<8x128xf32>
    %228 = vector.extract_strided_slice %224 {offsets = [16, 0], sizes = [8, 128], strides = [1, 1]} : vector<32x128xf32> to vector<8x128xf32>
    %229 = arith.addf %227, %228 : vector<8x128xf32>
    %230 = vector.extract_strided_slice %224 {offsets = [24, 0], sizes = [8, 128], strides = [1, 1]} : vector<32x128xf32> to vector<8x128xf32>
    %231 = arith.addf %229, %230 : vector<8x128xf32>
    %232 = arith.addf %189, %231 : vector<8x128xf32>
    %c32_88 = arith.constant 32 : index
    %c0_89 = arith.constant 0 : index
    %233 = vector.load %arg2[%c32_88, %c0_89] : memref<64x3xf32, #tpu.memory_space<vmem>>, vector<32x3xf32>
    %c32_90 = arith.constant 32 : index
    %c0_91 = arith.constant 0 : index
    %234 = vector.load %arg3[%c32_90, %c0_91] : memref<64x3xf32, #tpu.memory_space<vmem>>, vector<32x3xf32>
    %235 = vector.extract_strided_slice %233 {offsets = [0, 2], sizes = [32, 1], strides = [1, 1]} : vector<32x3xf32> to vector<32x1xf32>
    %236 = vector.extract_strided_slice %234 {offsets = [0, 2], sizes = [32, 1], strides = [1, 1]} : vector<32x3xf32> to vector<32x1xf32>
    %237 = vector.broadcast %235 : vector<32x1xf32> to vector<32x128xf32>
    %238 = vector.broadcast %187 : vector<1x128xf32> to vector<32x128xf32>
    %239 = arith.subf %237, %238 : vector<32x128xf32>
    %240 = vector.broadcast %236 : vector<32x1xf32> to vector<32x128xf32>
    %241 = vector.broadcast %188 : vector<1x128xf32> to vector<32x128xf32>
    %242 = arith.subf %240, %241 : vector<32x128xf32>
    %cst_92 = arith.constant 2.000000e-01 : f32
    %243 = vector.broadcast %cst_92 : f32 to vector<32x128xf32>
    %244 = arith.mulf %243, %242 : vector<32x128xf32>
    %245 = arith.subf %239, %244 : vector<32x128xf32>
    %cst_93 = arith.constant 0.000000e+00 : f32
    %246 = vector.broadcast %cst_93 : f32 to vector<32x128xf32>
    %247 = arith.cmpf olt, %239, %246 : vector<32x128xf32>
    %cst_94 = arith.constant 0.000000e+00 : f32
    %248 = vector.broadcast %cst_94 : f32 to vector<32x128xf32>
    %249 = arith.subf %248, %239 : vector<32x128xf32>
    %cst_95 = arith.constant 0.000000e+00 : f32
    %250 = vector.broadcast %cst_95 : f32 to vector<32x128xf32>
    %251 = arith.cmpf olt, %245, %250 : vector<32x128xf32>
    %cst_96 = arith.constant 0.000000e+00 : f32
    %252 = vector.broadcast %cst_96 : f32 to vector<32x128xf32>
    %253 = arith.subf %252, %245 : vector<32x128xf32>
    %254 = arith.subf %239, %242 : vector<32x128xf32>
    %cst_97 = arith.constant 0.000000e+00 : f32
    %255 = vector.broadcast %cst_97 : f32 to vector<32x128xf32>
    %256 = arith.maximumf %254, %255 : vector<32x128xf32>
    %257 = arith.select %251, %253, %256 : vector<32x128xi1>, vector<32x128xf32>
    %258 = arith.select %247, %249, %257 : vector<32x128xi1>, vector<32x128xf32>
    %cst_98 = arith.constant 0.000000e+00 : f32
    %259 = vector.broadcast %cst_98 : f32 to vector<32x128xf32>
    %260 = arith.cmpf olt, %242, %259 : vector<32x128xf32>
    %cst_99 = arith.constant 0.000000e+00 : f32
    %261 = vector.broadcast %cst_99 : f32 to vector<32x128xf32>
    %262 = arith.cmpf oeq, %242, %261 : vector<32x128xf32>
    %cst_100 = arith.constant 5.000000e-01 : f32
    %263 = vector.broadcast %cst_100 : f32 to vector<32x128xf32>
    %264 = arith.mulf %263, %258 : vector<32x128xf32>
    %265 = arith.select %262, %264, %258 : vector<32x128xi1>, vector<32x128xf32>
    %cst_101 = arith.constant 0.000000e+00 : f32
    %266 = vector.broadcast %cst_101 : f32 to vector<32x128xf32>
    %267 = arith.select %260, %266, %265 : vector<32x128xi1>, vector<32x128xf32>
    %268 = vector.extract_strided_slice %267 {offsets = [0, 0], sizes = [8, 128], strides = [1, 1]} : vector<32x128xf32> to vector<8x128xf32>
    %269 = vector.extract_strided_slice %267 {offsets = [8, 0], sizes = [8, 128], strides = [1, 1]} : vector<32x128xf32> to vector<8x128xf32>
    %270 = arith.addf %268, %269 : vector<8x128xf32>
    %271 = vector.extract_strided_slice %267 {offsets = [16, 0], sizes = [8, 128], strides = [1, 1]} : vector<32x128xf32> to vector<8x128xf32>
    %272 = arith.addf %270, %271 : vector<8x128xf32>
    %273 = vector.extract_strided_slice %267 {offsets = [24, 0], sizes = [8, 128], strides = [1, 1]} : vector<32x128xf32> to vector<8x128xf32>
    %274 = arith.addf %272, %273 : vector<8x128xf32>
    %275 = arith.addf %232, %274 : vector<8x128xf32>
    %c16 = arith.constant 16 : index
    %c0_102 = arith.constant 0 : index
    %276 = vector.load %arg6[%c16, %c0_102] : memref<24x128xf32, #tpu.memory_space<vmem>>, vector<8x128xf32>
    %277 = arith.addf %276, %275 : vector<8x128xf32>
    %c16_103 = arith.constant 16 : index
    %c0_104 = arith.constant 0 : index
    %278 = vector.load %arg6[%c16_103, %c0_104] : memref<24x128xf32, #tpu.memory_space<vmem>>, vector<8x128xf32>
    tpu.vector_store %arg6[%c16_103, %c0_104], %277 {strides = array<i32>} : memref<24x128xf32, #tpu.memory_space<vmem>>, vector<8x128xf32>,
    return
  }
  func.func @transform_0(%arg0: i32, %arg1: i32) -> (i32, i32) {
    %c0_i32 = arith.constant 0 : i32
    %c0_i32_0 = arith.constant 0 : i32
    return %arg1, %c0_i32 : i32, i32
  }
  func.func @transform_1(%arg0: i32, %arg1: i32) -> (i32, i32) {
    %c0_i32 = arith.constant 0 : i32
    %c0_i32_0 = arith.constant 0 : i32
    return %arg1, %c0_i32 : i32, i32
  }
  func.func @transform_2(%arg0: i32, %arg1: i32) -> (i32, i32) {
    %c0_i32 = arith.constant 0 : i32
    %c0_i32_0 = arith.constant 0 : i32
    return %c0_i32, %arg0 : i32, i32
  }
  func.func @transform_3(%arg0: i32, %arg1: i32) -> (i32, i32) {
    %c0_i32 = arith.constant 0 : i32
    %c0_i32_0 = arith.constant 0 : i32
    return %c0_i32, %arg0 : i32, i32
  }
  func.func @transform_4(%arg0: i32, %arg1: i32) -> (i32, i32) {
    %c0_i32 = arith.constant 0 : i32
    %c0_i32_0 = arith.constant 0 : i32
    return %c0_i32, %arg0 : i32, i32
  }
}

</mosaic_0001>

<llo_original>
// kernel: tpu_custom_call.1
$region0: #{tpu_custom_call.1}
  #allocation0 [shape = 'u32[]', space=smem, size = 0x4, offset = 0x4, fixed_abs, tag = 'smem constant byte address 0x4 - core index']
  #allocation1 [shape = 'u32[144,128]{1,0:T(1,128)}', space=vmem, size = 0x12000, scoped, tag = 'internal scratch']
  %s0 = inlined_call_operand.vmem [shape: f32[256,3], index: 0, kind: input, shape index: {}]
  %s1 = inlined_call_operand.vmem [shape: f32[256,3], index: 1, kind: input, shape index: {}]
  %s2 = inlined_call_operand.vmem [shape: f32[8,256], index: 2, kind: input, shape index: {}]
  %s3 = inlined_call_operand.vmem [shape: f32[8,256], index: 3, kind: input, shape index: {}]
  %s4 = inlined_call_operand.hbm [shape: f32[24,256], index: 4, kind: output, shape index: {}]
  %s5 = sld [smem:[#allocation0]]
  $region53: #{tpu_custom_call.1} parent=0
    _
  %s7 = ssub.s32 1, %s5
  %s8 = scalar_select 0, %s7, %s5
  $region1: #{tpu_custom_call.1} parent=0
    #allocation2 [shape = 'u8[24576]{0}', space=vmem, size = 0x6000, scoped, tag = 'output window, operand 0']
    #allocation3 [shape = 's32[2]{0}', space=sflag, size = 0x8, scoped, tag = 'scoped memory for tpu_custom_call.1']
    %9 = vsyncpa [#allocation3], 0
    %s10 = scalar_lea.sflag [#allocation3], 1
    %11 = vsyncpa %s10, 0
    loop: start=0, step=1, limit=10
    $region2: #{tpu_custom_call.1} parent=1 // loop_pre_header
      _
    $region3: #{tpu_custom_call.1} parent=1 // loop_header
      %s13 = sphi 0, %s17
      %p14 = scmp.ge.s32.totalorder %s13, 10
      %s20 = sphi 0, %s32
      %s21 = sphi 0, %s28
      %s22 = sphi 0, %s20
      %s23 = sphi 0, %s21
      %s24 = sphi 0, %s22
      %s25 = sphi 0, %s23
      %s35 = sphi 0, %s37
      %s38 = sphi 0, %s35
      %s39 = sphi 0, %s38
      %s55 = sphi 0, %s39
      %s61 = sphi 0, %s63
      %s64 = sphi 0, %s61
      %s65 = sphi 0, %s64
      %s81 = sphi 0, %s65
      %s87 = sphi 0, %s89
      %s90 = sphi 0, %s87
      %s91 = sphi 0, %s90
      %s107 = sphi 0, %s91
      %s113 = sphi 0, %s115
      %s116 = sphi 0, %s113
      %s117 = sphi 0, %s116
      %s133 = sphi 0, %s117
      %s139 = sphi 0, %s141
      %s142 = sphi 0, %s139
      %s143 = sphi 0, %s142
      %s159 = sphi 0, %s143
    $region4: #{tpu_custom_call.1} parent=1 // loop_header_branch
      %16 = sbr.rel (%p14) target = $region8
    $region5: #{tpu_custom_call.1} parent=1 // loop_body
      %s18 = ssub.s32 %s13, 1
      %s19 = ssub.s32 %s13, 2
      %s26 = sadd.s32 1, %s21
      %p27 = scmp.ge.s32.totalorder %s26, 4
      %s28 = scalar_select %p27, 0, %s26
      %s29 = sadd.s32 1, %s20
      %s30 = scalar_select %p27, %s29, %s20
      %p31 = scmp.ge.s32.totalorder %s30, 2
      %s32 = scalar_select %p31, 0, %s30
      %s33 = ssub.s32 %s21, %s28
      %p34 = scmp.eq.s32.totalorder %s33, 0
      %s36 = sadd.s32 %s35, 1
      %s37 = scalar_select %p34, %s35, %s36
      %p40 = pneg %p34
      %p41 = scmp.eq.s32.totalorder %s13, 7
      %p42 = por %p40, %p41
      %p43 = scmp.ne.s32.totalorder %s35, %s38
      %p44 = scmp.eq.s32.totalorder %s13, 0
      %p45 = por %p43, %p44
      %p46 = scmp.ne.s32.totalorder %s35, %s38
      %p47 = scmp.eq.s32.totalorder %s18, 7
      %p48 = por %p46, %p47
      %p49 = scmp.ne.s32.totalorder %s38, %s39
      %p50 = scmp.eq.s32.totalorder %s18, 0
      %p51 = por %p49, %p50
      %p52 = scmp.ne.s32.totalorder %s38, %s39
      %p53 = scmp.eq.s32.totalorder %s19, 7
      %p54 = por %p52, %p53
      %p56 = scmp.ne.s32.totalorder %s39, %s55
      %p57 = scmp.eq.s32.totalorder %s19, 0
      %p58 = por %p56, %p57
      %s59 = ssub.s32 %s21, %s28
      %p60 = scmp.eq.s32.totalorder %s59, 0
      %s62 = sadd.s32 %s61, 1
      %s63 = scalar_select %p60, %s61, %s62
      %p66 = pneg %p60
      %p67 = scmp.eq.s32.totalorder %s13, 7
      %p68 = por %p66, %p67
      %p69 = scmp.ne.s32.totalorder %s61, %s64
      %p70 = scmp.eq.s32.totalorder %s13, 0
      %p71 = por %p69, %p70
      %p72 = scmp.ne.s32.totalorder %s61, %s64
      %p73 = scmp.eq.s32.totalorder %s18, 7
      %p74 = por %p72, %p73
      %p75 = scmp.ne.s32.totalorder %s64, %s65
      %p76 = scmp.eq.s32.totalorder %s18, 0
      %p77 = por %p75, %p76
      %p78 = scmp.ne.s32.totalorder %s64, %s65
      %p79 = scmp.eq.s32.totalorder %s19, 7
      %p80 = por %p78, %p79
      %p82 = scmp.ne.s32.totalorder %s65, %s81
      %p83 = scmp.eq.s32.totalorder %s19, 0
      %p84 = por %p82, %p83
      %s85 = ssub.s32 %s20, %s32
      %p86 = scmp.eq.s32.totalorder %s85, 0
      %s88 = sadd.s32 %s87, 1
      %s89 = scalar_select %p86, %s87, %s88
      %p92 = pneg %p86
      %p93 = scmp.eq.s32.totalorder %s13, 7
      %p94 = por %p92, %p93
      %p95 = scmp.ne.s32.totalorder %s87, %s90
      %p96 = scmp.eq.s32.totalorder %s13, 0
      %p97 = por %p95, %p96
      %p98 = scmp.ne.s32.totalorder %s87, %s90
      %p99 = scmp.eq.s32.totalorder %s18, 7
      %p100 = por %p98, %p99
      %p101 = scmp.ne.s32.totalorder %s90, %s91
      %p102 = scmp.eq.s32.totalorder %s18, 0
      %p103 = por %p101, %p102
      %p104 = scmp.ne.s32.totalorder %s90, %s91
      %p105 = scmp.eq.s32.totalorder %s19, 7
      %p106 = por %p104, %p105
      %p108 = scmp.ne.s32.totalorder %s91, %s107
      %p109 = scmp.eq.s32.totalorder %s19, 0
      %p110 = por %p108, %p109
      %s111 = ssub.s32 %s20, %s32
      %p112 = scmp.eq.s32.totalorder %s111, 0
      %s114 = sadd.s32 %s113, 1
      %s115 = scalar_select %p112, %s113, %s114
      %p118 = pneg %p112
      %p119 = scmp.eq.s32.totalorder %s13, 7
      %p120 = por %p118, %p119
      %p121 = scmp.ne.s32.totalorder %s113, %s116
      %p122 = scmp.eq.s32.totalorder %s13, 0
      %p123 = por %p121, %p122
      %p124 = scmp.ne.s32.totalorder %s113, %s116
      %p125 = scmp.eq.s32.totalorder %s18, 7
      %p126 = por %p124, %p125
      %p127 = scmp.ne.s32.totalorder %s116, %s117
      %p128 = scmp.eq.s32.totalorder %s18, 0
      %p129 = por %p127, %p128
      %p130 = scmp.ne.s32.totalorder %s116, %s117
      %p131 = scmp.eq.s32.totalorder %s19, 7
      %p132 = por %p130, %p131
      %p134 = scmp.ne.s32.totalorder %s117, %s133
      %p135 = scmp.eq.s32.totalorder %s19, 0
      %p136 = por %p134, %p135
      %s137 = ssub.s32 %s20, %s32
      %p138 = scmp.eq.s32.totalorder %s137, 0
      %s140 = sadd.s32 %s139, 1
      %s141 = scalar_select %p138, %s139, %s140
      %p144 = pneg %p138
      %p145 = scmp.eq.s32.totalorder %s13, 7
      %p146 = por %p144, %p145
      %p147 = scmp.ne.s32.totalorder %s139, %s142
      %p148 = scmp.eq.s32.totalorder %s13, 0
      %p149 = por %p147, %p148
      %p150 = scmp.ne.s32.totalorder %s139, %s142
      %p151 = scmp.eq.s32.totalorder %s18, 7
      %p152 = por %p150, %p151
      %p153 = scmp.ne.s32.totalorder %s142, %s143
      %p154 = scmp.eq.s32.totalorder %s18, 0
      %p155 = por %p153, %p154
      %p156 = scmp.ne.s32.totalorder %s142, %s143
      %p157 = scmp.eq.s32.totalorder %s19, 7
      %p158 = por %p156, %p157
      %p160 = scmp.ne.s32.totalorder %s143, %s159
      %p161 = scmp.eq.s32.totalorder %s19, 0
      %p162 = por %p160, %p161
      %p163 = scmp.le.s32.totalorder 1, %s13
      %p164 = scmp.lt.s32.totalorder %s13, 9
      %p165 = pnand %p163, %p164
      %p166 = pneg %p165
      // Predicated region
      $region9: #{tpu_custom_call.1} parent=5 // pred_check
        _
      $region10: #{tpu_custom_call.1} parent=5 // pred_check_branch
        %168 = sbr.rel (%p165) target = $region12
      $region11: #{tpu_custom_call.1} parent=5 // pred_region
        %s169 = ssub.s32 %s13, 1
      $region12: #{tpu_custom_call.1} parent=5 // pred_fallthru
        _
      %p170 = scmp.lt.s32.totalorder %s13, 8
      // Predicated region
      $region13: #{tpu_custom_call.1} parent=5 // pred_check
        %p171 = pneg %p170
      $region14: #{tpu_custom_call.1} parent=5 // pred_check_branch
        %173 = sbr.rel (%p171) target = $region16
      $region15: #{tpu_custom_call.1} parent=5 // pred_region
        // Predicated region
        $region17: #{tpu_custom_call.1} parent=15 // pred_check
          %p174 = pneg %p45
        $region18: #{tpu_custom_call.1} parent=15 // pred_check_branch
          %176 = sbr.rel (%p174) target = $region20
        $region19: #{tpu_custom_call.1} parent=15 // pred_region
          %s177 = smul.u32 8, %s21
          %p178 = scmp.lt.s32.totalorder %s177, 31
          %s179 = scalar_select %p178, %s177, 31
          %s180 = smul.addr %s179, 8
          %s181 = scalar_lea.vmem %s0, %s180
          %s182 = smul.u32 8, %s21
        $region20: #{tpu_custom_call.1} parent=15 // pred_fallthru
          _
        // Predicated region
        $region21: #{tpu_custom_call.1} parent=15 // pred_check
          %p183 = pneg %p71
        $region22: #{tpu_custom_call.1} parent=15 // pred_check_branch
          %185 = sbr.rel (%p183) target = $region24
        $region23: #{tpu_custom_call.1} parent=15 // pred_region
          %s186 = smul.u32 8, %s21
          %p187 = scmp.lt.s32.totalorder %s186, 31
          %s188 = scalar_select %p187, %s186, 31
          %s189 = smul.addr %s188, 8
          %s190 = scalar_lea.vmem %s1, %s189
          %s191 = smul.u32 8, %s21
        $region24: #{tpu_custom_call.1} parent=15 // pred_fallthru
          _
        // Predicated region
        $region25: #{tpu_custom_call.1} parent=15 // pred_check
          %p192 = pneg %p97
        $region26: #{tpu_custom_call.1} parent=15 // pred_check_branch
          %194 = sbr.rel (%p192) target = $region28
        $region27: #{tpu_custom_call.1} parent=15 // pred_region
          %p195 = scmp.lt.s32.totalorder %s20, 1
          %s196 = scalar_select %p195, %s20, 1
          %s197 = smul.addr %s196, 8
          %s198 = scalar_lea.vmem %s2, %s197
        $region28: #{tpu_custom_call.1} parent=15 // pred_fallthru
          _
        // Predicated region
        $region29: #{tpu_custom_call.1} parent=15 // pred_check
          %p199 = pneg %p123
        $region30: #{tpu_custom_call.1} parent=15 // pred_check_branch
          %201 = sbr.rel (%p199) target = $region32
        $region31: #{tpu_custom_call.1} parent=15 // pred_region
          %p202 = scmp.lt.s32.totalorder %s20, 1
          %s203 = scalar_select %p202, %s20, 1
          %s204 = smul.addr %s203, 8
          %s205 = scalar_lea.vmem %s3, %s204
        $region32: #{tpu_custom_call.1} parent=15 // pred_fallthru
          _
      $region16: #{tpu_custom_call.1} parent=5 // pred_fallthru
        _
      %p206 = scmp.le.s32.totalorder 1, %s13
      %p207 = scmp.lt.s32.totalorder %s13, 9
      %p208 = pnand %p206, %p207
      %p209 = pneg %p208
      // Predicated region
      $region33: #{tpu_custom_call.1} parent=5 // pred_check
        _
      $region34: #{tpu_custom_call.1} parent=5 // pred_check_branch
        %211 = sbr.rel (%p208) target = $region36
      $region35: #{tpu_custom_call.1} parent=5 // pred_region
        %s212 = ssub.s32 %s13, 1
        %s213 = smul.u32 8, %s23
        %p214 = scmp.lt.s32.totalorder %s213, 31
        %s215 = scalar_select %p214, %s213, 31
        %s216 = smul.addr %s215, 8
        %s217 = scalar_lea.vmem %s0, %s216
        %p218 = pneg %p51
        %p219 = pneg %p48
        %s220 = smul.u32 8, %s23
        %p221 = scmp.lt.s32.totalorder %s220, 31
        %s222 = scalar_select %p221, %s220, 31
        %s223 = smul.addr %s222, 8
        %s224 = scalar_lea.vmem %s1, %s223
        %p225 = pneg %p77
        %p226 = pneg %p74
        %p227 = scmp.lt.s32.totalorder %s22, 1
        %s228 = scalar_select %p227, %s22, 1
        %s229 = smul.addr %s228, 8
        %s230 = scalar_lea.vmem %s2, %s229
        %p231 = pneg %p103
        %p232 = pneg %p100
        %p233 = scmp.lt.s32.totalorder %s22, 1
        %s234 = scalar_select %p233, %s22, 1
        %s235 = smul.addr %s234, 8
        %s236 = scalar_lea.vmem %s3, %s235
        %p237 = pneg %p129
        %p238 = pneg %p126
        %p239 = pneg %p155
        %p240 = pneg %p152
        %s241 = sand.u32 %s142, 1
        %s242 = scalar_lea.sflag [#allocation3], %s241
        %s243 = sand.u32 %s142, 1
        %s244 = smul.addr %s243, 24
        %s245 = scalar_lea.vmem [#allocation2], %s244
        %s246 = smul.u32 8, %s23
        %p247 = scmp.lt.s32.totalorder %s246, 31
        %s248 = scalar_select %p247, %s246, 31
        %s249 = smul.addr %s248, 8
        %s250 = scalar_lea.vmem %s0, %s249
        %s251 = smul.u32 8, %s23
        %s252 = smul.u32 8, %s23
        %p253 = scmp.lt.s32.totalorder %s252, 31
        %s254 = scalar_select %p253, %s252, 31
        %s255 = smul.addr %s254, 8
        %s256 = scalar_lea.vmem %s1, %s255
        %s257 = smul.u32 8, %s23
        %p258 = scmp.lt.s32.totalorder %s22, 1
        %s259 = scalar_select %p258, %s22, 1
        %s260 = smul.addr %s259, 8
        %s261 = scalar_lea.vmem %s2, %s260
        %p262 = scmp.lt.s32.totalorder %s22, 1
        %s263 = scalar_select %p262, %s22, 1
        %s264 = smul.addr %s263, 8
        %s265 = scalar_lea.vmem %s3, %s264
        %p266 = scmp.eq.s32.totalorder %s23, 0
        // Predicated region
        $region37: #{tpu_custom_call.1} parent=35 // pred_check
          %p267 = pneg %p266
        $region38: #{tpu_custom_call.1} parent=35 // pred_check_branch
          %269 = sbr.rel (%p267) target = $region40
        $region39: #{tpu_custom_call.1} parent=35 // pred_region
          %270 = vst [vmem:[%s245] sm:$0xff] 0.0
          %271 = vst [vmem:[%s245 + $0x8] sm:$0xff] 0.0
          %272 = vst [vmem:[%s245 + $0x10] sm:$0xff] 0.0
        $region40: #{tpu_custom_call.1} parent=35 // pred_fallthru
          _
        %v273 = vld [vmem:[%s261] sm:$0x1]
        %v274 = vld [vmem:[%s265] sm:$0x1]
        %v275 = vld [vmem:[%s250] sm:$0xff]
        %v276 = vld [vmem:[%s250 + $0x8] sm:$0xff]
        %v277 = vld [vmem:[%s250 + $0x10] sm:$0xff]
        %v278 = vld [vmem:[%s250 + $0x18] sm:$0xff]
        %v279 = vld [vmem:[%s256] sm:$0xff]
        %v280 = vld [vmem:[%s256 + $0x8] sm:$0xff]
        %v281 = vld [vmem:[%s256 + $0x10] sm:$0xff]
        %v282 = vld [vmem:[%s256 + $0x18] sm:$0xff]
        %284 = vset.pattern.permute.xlu0 0
        %285 = vperm.xlu0 %284, %v275
        %v286 = vpop.permute.xlu0 %285
        %289 = vset.pattern.permute.xlu0 0
        %290 = vperm.xlu0 %289, %v276
        %v291 = vpop.permute.xlu0 %290
        %294 = vset.pattern.permute.xlu0 0
        %295 = vperm.xlu0 %294, %v277
        %v296 = vpop.permute.xlu0 %295
        %299 = vset.pattern.permute.xlu0 0
        %300 = vperm.xlu0 %299, %v278
        %v301 = vpop.permute.xlu0 %300
        %v303 = vlaneseq
        %v304 = vshrl.u32 %v303, 7
        %v305 = vsub.s32 0, %v304
        %v306 = vrot.slane %v273, %v305
        %v307 = vsub.f32 %v286, %v306
        %v308 = vsub.f32 %v291, %v306
        %v309 = vsub.f32 %v296, %v306
        %v310 = vsub.f32 %v301, %v306
        %312 = vset.pattern.permute.xlu0 0
        %313 = vperm.xlu0 %312, %v279
        %v314 = vpop.permute.xlu0 %313
        %317 = vset.pattern.permute.xlu0 0
        %318 = vperm.xlu0 %317, %v280
        %v319 = vpop.permute.xlu0 %318
        %322 = vset.pattern.permute.xlu0 0
        %323 = vperm.xlu0 %322, %v281
        %v324 = vpop.permute.xlu0 %323
        %327 = vset.pattern.permute.xlu0 0
        %328 = vperm.xlu0 %327, %v282
        %v329 = vpop.permute.xlu0 %328
        %v331 = vlaneseq
        %v332 = vshrl.u32 %v331, 7
        %v333 = vsub.s32 0, %v332
        %v334 = vrot.slane %v274, %v333
        %v335 = vsub.f32 %v314, %v334
        %v336 = vsub.f32 %v319, %v334
        %v337 = vsub.f32 %v324, %v334
        %v338 = vsub.f32 %v329, %v334
        %v339 = vmul.f32 %v335, 0.2
        %v340 = vmul.f32 %v336, 0.2
        %v341 = vmul.f32 %v337, 0.2
        %v342 = vmul.f32 %v338, 0.2
        %v343 = vsub.f32 %v307, %v339
        %v344 = vsub.f32 %v308, %v340
        %v345 = vsub.f32 %v309, %v341
        %v346 = vsub.f32 %v310, %v342
        %vm347 = vcmp.lt.f32.partialorder %v307, 0.0
        %vm348 = vcmp.lt.f32.partialorder %v308, 0.0
        %vm349 = vcmp.lt.f32.partialorder %v309, 0.0
        %vm350 = vcmp.lt.f32.partialorder %v310, 0.0
        %v351 = vsub.f32 0.0, %v307
        %v352 = vsub.f32 0.0, %v308
        %v353 = vsub.f32 0.0, %v309
        %v354 = vsub.f32 0.0, %v310
        %vm355 = vcmp.lt.f32.partialorder %v343, 0.0
        %vm356 = vcmp.lt.f32.partialorder %v344, 0.0
        %vm357 = vcmp.lt.f32.partialorder %v345, 0.0
        %vm358 = vcmp.lt.f32.partialorder %v346, 0.0
        %v359 = vsub.f32 0.0, %v343
        %v360 = vsub.f32 0.0, %v344
        %v361 = vsub.f32 0.0, %v345
        %v362 = vsub.f32 0.0, %v346
        %v363 = vsub.f32 %v307, %v335
        %v364 = vsub.f32 %v308, %v336
        %v365 = vsub.f32 %v309, %v337
        %v366 = vsub.f32 %v310, %v338
        %v367 = vmax.f32 %v363, 0.0
        %v368 = vmax.f32 %v364, 0.0
        %v369 = vmax.f32 %v365, 0.0
        %v370 = vmax.f32 %v366, 0.0
        %v371 = vsel %vm355, %v359, %v367
        %v372 = vsel %vm356, %v360, %v368
        %v373 = vsel %vm357, %v361, %v369
        %v374 = vsel %vm358, %v362, %v370
        %v375 = vsel %vm347, %v351, %v371
        %v376 = vsel %vm348, %v352, %v372
        %v377 = vsel %vm349, %v353, %v373
        %v378 = vsel %vm350, %v354, %v374
        %vm379 = vcmp.lt.f32.partialorder %v335, 0.0
        %vm380 = vcmp.lt.f32.partialorder %v336, 0.0
        %vm381 = vcmp.lt.f32.partialorder %v337, 0.0
        %vm382 = vcmp.lt.f32.partialorder %v338, 0.0
        %vm383 = vcmp.eq.f32.partialorder %v335, 0.0
        %vm384 = vcmp.eq.f32.partialorder %v336, 0.0
        %vm385 = vcmp.eq.f32.partialorder %v337, 0.0
        %vm386 = vcmp.eq.f32.partialorder %v338, 0.0
        %v387 = vmul.f32 %v375, 0.5
        %v388 = vmul.f32 %v376, 0.5
        %v389 = vmul.f32 %v377, 0.5
        %v390 = vmul.f32 %v378, 0.5
        %v391 = vsel %vm383, %v387, %v375
        %v392 = vsel %vm384, %v388, %v376
        %v393 = vsel %vm385, %v389, %v377
        %v394 = vsel %vm386, %v390, %v378
        %v395 = vsel %vm379, 0.0, %v391
        %v396 = vsel %vm380, 0.0, %v392
        %v397 = vsel %vm381, 0.0, %v393
        %v398 = vsel %vm382, 0.0, %v394
        %v399 = vadd.f32 %v395, %v396
        %v400 = vadd.f32 %v399, %v397
        %v401 = vadd.f32 %v400, %v398
        %v402 = vadd.f32 %v401, 0.0
        %v403 = vld [vmem:[%s250 + $0x20] sm:$0xff]
        %v404 = vld [vmem:[%s250 + $0x28] sm:$0xff]
        %v405 = vld [vmem:[%s250 + $0x30] sm:$0xff]
        %v406 = vld [vmem:[%s250 + $0x38] sm:$0xff]
        %v407 = vld [vmem:[%s256 + $0x20] sm:$0xff]
        %v408 = vld [vmem:[%s256 + $0x28] sm:$0xff]
        %v409 = vld [vmem:[%s256 + $0x30] sm:$0xff]
        %v410 = vld [vmem:[%s256 + $0x38] sm:$0xff]
        %412 = vset.pattern.permute.xlu0 0
        %413 = vperm.xlu0 %412, %v403
        %v414 = vpop.permute.xlu0 %413
        %417 = vset.pattern.permute.xlu0 0
        %418 = vperm.xlu0 %417, %v404
        %v419 = vpop.permute.xlu0 %418
        %422 = vset.pattern.permute.xlu0 0
        %423 = vperm.xlu0 %422, %v405
        %v424 = vpop.permute.xlu0 %423
        %427 = vset.pattern.permute.xlu0 0
        %428 = vperm.xlu0 %427, %v406
        %v429 = vpop.permute.xlu0 %428
        %v431 = vsub.f32 %v414, %v306
        %v432 = vsub.f32 %v419, %v306
        %v433 = vsub.f32 %v424, %v306
        %v434 = vsub.f32 %v429, %v306
        %436 = vset.pattern.permute.xlu0 0
        %437 = vperm.xlu0 %436, %v407
        %v438 = vpop.permute.xlu0 %437
        %441 = vset.pattern.permute.xlu0 0
        %442 = vperm.xlu0 %441, %v408
        %v443 = vpop.permute.xlu0 %442
        %446 = vset.pattern.permute.xlu0 0
        %447 = vperm.xlu0 %446, %v409
        %v448 = vpop.permute.xlu0 %447
        %451 = vset.pattern.permute.xlu0 0
        %452 = vperm.xlu0 %451, %v410
        %v453 = vpop.permute.xlu0 %452
        %v455 = vsub.f32 %v438, %v334
        %v456 = vsub.f32 %v443, %v334
        %v457 = vsub.f32 %v448, %v334
        %v458 = vsub.f32 %v453, %v334
        %v459 = vmul.f32 %v455, 0.2
        %v460 = vmul.f32 %v456, 0.2
        %v461 = vmul.f32 %v457, 0.2
        %v462 = vmul.f32 %v458, 0.2
        %v463 = vsub.f32 %v431, %v459
        %v464 = vsub.f32 %v432, %v460
        %v465 = vsub.f32 %v433, %v461
        %v466 = vsub.f32 %v434, %v462
        %vm467 = vcmp.lt.f32.partialorder %v431, 0.0
        %vm468 = vcmp.lt.f32.partialorder %v432, 0.0
        %vm469 = vcmp.lt.f32.partialorder %v433, 0.0
        %vm470 = vcmp.lt.f32.partialorder %v434, 0.0
        %v471 = vsub.f32 0.0, %v431
        %v472 = vsub.f32 0.0, %v432
        %v473 = vsub.f32 0.0, %v433
        %v474 = vsub.f32 0.0, %v434
        %vm475 = vcmp.lt.f32.partialorder %v463, 0.0
        %vm476 = vcmp.lt.f32.partialorder %v464, 0.0
        %vm477 = vcmp.lt.f32.partialorder %v465, 0.0
        %vm478 = vcmp.lt.f32.partialorder %v466, 0.0
        %v479 = vsub.f32 0.0, %v463
        %v480 = vsub.f32 0.0, %v464
        %v481 = vsub.f32 0.0, %v465
        %v482 = vsub.f32 0.0, %v466
        %v483 = vsub.f32 %v431, %v455
        %v484 = vsub.f32 %v432, %v456
        %v485 = vsub.f32 %v433, %v457
        %v486 = vsub.f32 %v434, %v458
        %v487 = vmax.f32 %v483, 0.0
        %v488 = vmax.f32 %v484, 0.0
        %v489 = vmax.f32 %v485, 0.0
        %v490 = vmax.f32 %v486, 0.0
        %v491 = vsel %vm475, %v479, %v487
        %v492 = vsel %vm476, %v480, %v488
        %v493 = vsel %vm477, %v481, %v489
        %v494 = vsel %vm478, %v482, %v490
        %v495 = vsel %vm467, %v471, %v491
        %v496 = vsel %vm468, %v472, %v492
        %v497 = vsel %vm469, %v473, %v493
        %v498 = vsel %vm470, %v474, %v494
        %vm499 = vcmp.lt.f32.partialorder %v455, 0.0
        %vm500 = vcmp.lt.f32.partialorder %v456, 0.0
        %vm501 = vcmp.lt.f32.partialorder %v457, 0.0
        %vm502 = vcmp.lt.f32.partialorder %v458, 0.0
        %vm503 = vcmp.eq.f32.partialorder %v455, 0.0
        %vm504 = vcmp.eq.f32.partialorder %v456, 0.0
        %vm505 = vcmp.eq.f32.partialorder %v457, 0.0
        %vm506 = vcmp.eq.f32.partialorder %v458, 0.0
        %v507 = vmul.f32 %v495, 0.5
        %v508 = vmul.f32 %v496, 0.5
        %v509 = vmul.f32 %v497, 0.5
        %v510 = vmul.f32 %v498, 0.5
        %v511 = vsel %vm503, %v507, %v495
        %v512 = vsel %vm504, %v508, %v496
        %v513 = vsel %vm505, %v509, %v497
        %v514 = vsel %vm506, %v510, %v498
        %v515 = vsel %vm499, 0.0, %v511
        %v516 = vsel %vm500, 0.0, %v512
        %v517 = vsel %vm501, 0.0, %v513
        %v518 = vsel %vm502, 0.0, %v514
        %v519 = vadd.f32 %v515, %v516
        %v520 = vadd.f32 %v519, %v517
        %v521 = vadd.f32 %v520, %v518
        %v522 = vadd.f32 %v402, %v521
        %v523 = vld [vmem:[%s245] sm:$0xff]
        %v524 = vadd.f32 %v523, %v522
        %525 = vst [vmem:[%s245] sm:$0xff] %v524
        %v526 = vld [vmem:[%s261 + $0x1] sm:$0x1]
        %v527 = vld [vmem:[%s265 + $0x1] sm:$0x1]
        %v528 = vld [vmem:[%s250] sm:$0xff]
        %v529 = vld [vmem:[%s250 + $0x8] sm:$0xff]
        %v530 = vld [vmem:[%s250 + $0x10] sm:$0xff]
        %v531 = vld [vmem:[%s250 + $0x18] sm:$0xff]
        %v532 = vld [vmem:[%s256] sm:$0xff]
        %v533 = vld [vmem:[%s256 + $0x8] sm:$0xff]
        %v534 = vld [vmem:[%s256 + $0x10] sm:$0xff]
        %v535 = vld [vmem:[%s256 + $0x18] sm:$0xff]
        %537 = vset.pattern.permute.xlu0 1
        %538 = vperm.xlu0 %537, %v528
        %v539 = vpop.permute.xlu0 %538
        %542 = vset.pattern.permute.xlu0 1
        %543 = vperm.xlu0 %542, %v529
        %v544 = vpop.permute.xlu0 %543
        %547 = vset.pattern.permute.xlu0 1
        %548 = vperm.xlu0 %547, %v530
        %v549 = vpop.permute.xlu0 %548
        %552 = vset.pattern.permute.xlu0 1
        %553 = vperm.xlu0 %552, %v531
        %v554 = vpop.permute.xlu0 %553
        %v556 = vlaneseq
        %v557 = vshrl.u32 %v556, 7
        %v558 = vsub.s32 0, %v557
        %v559 = vrot.slane %v526, %v558
        %v560 = vsub.f32 %v539, %v559
        %v561 = vsub.f32 %v544, %v559
        %v562 = vsub.f32 %v549, %v559
        %v563 = vsub.f32 %v554, %v559
        %565 = vset.pattern.permute.xlu0 1
        %566 = vperm.xlu0 %565, %v532
        %v567 = vpop.permute.xlu0 %566
        %570 = vset.pattern.permute.xlu0 1
        %571 = vperm.xlu0 %570, %v533
        %v572 = vpop.permute.xlu0 %571
        %575 = vset.pattern.permute.xlu0 1
        %576 = vperm.xlu0 %575, %v534
        %v577 = vpop.permute.xlu0 %576
        %580 = vset.pattern.permute.xlu0 1
        %581 = vperm.xlu0 %580, %v535
        %v582 = vpop.permute.xlu0 %581
        %v584 = vlaneseq
        %v585 = vshrl.u32 %v584, 7
        %v586 = vsub.s32 0, %v585
        %v587 = vrot.slane %v527, %v586
        %v588 = vsub.f32 %v567, %v587
        %v589 = vsub.f32 %v572, %v587
        %v590 = vsub.f32 %v577, %v587
        %v591 = vsub.f32 %v582, %v587
        %v592 = vmul.f32 %v588, 0.2
        %v593 = vmul.f32 %v589, 0.2
        %v594 = vmul.f32 %v590, 0.2
        %v595 = vmul.f32 %v591, 0.2
        %v596 = vsub.f32 %v560, %v592
        %v597 = vsub.f32 %v561, %v593
        %v598 = vsub.f32 %v562, %v594
        %v599 = vsub.f32 %v563, %v595
        %vm600 = vcmp.lt.f32.partialorder %v560, 0.0
        %vm601 = vcmp.lt.f32.partialorder %v561, 0.0
        %vm602 = vcmp.lt.f32.partialorder %v562, 0.0
        %vm603 = vcmp.lt.f32.partialorder %v563, 0.0
        %v604 = vsub.f32 0.0, %v560
        %v605 = vsub.f32 0.0, %v561
        %v606 = vsub.f32 0.0, %v562
        %v607 = vsub.f32 0.0, %v563
        %vm608 = vcmp.lt.f32.partialorder %v596, 0.0
        %vm609 = vcmp.lt.f32.partialorder %v597, 0.0
        %vm610 = vcmp.lt.f32.partialorder %v598, 0.0
        %vm611 = vcmp.lt.f32.partialorder %v599, 0.0
        %v612 = vsub.f32 0.0, %v596
        %v613 = vsub.f32 0.0, %v597
        %v614 = vsub.f32 0.0, %v598
        %v615 = vsub.f32 0.0, %v599
        %v616 = vsub.f32 %v560, %v588
        %v617 = vsub.f32 %v561, %v589
        %v618 = vsub.f32 %v562, %v590
        %v619 = vsub.f32 %v563, %v591
        %v620 = vmax.f32 %v616, 0.0
        %v621 = vmax.f32 %v617, 0.0
        %v622 = vmax.f32 %v618, 0.0
        %v623 = vmax.f32 %v619, 0.0
        %v624 = vsel %vm608, %v612, %v620
        %v625 = vsel %vm609, %v613, %v621
        %v626 = vsel %vm610, %v614, %v622
        %v627 = vsel %vm611, %v615, %v623
        %v628 = vsel %vm600, %v604, %v624
        %v629 = vsel %vm601, %v605, %v625
        %v630 = vsel %vm602, %v606, %v626
        %v631 = vsel %vm603, %v607, %v627
        %vm632 = vcmp.lt.f32.partialorder %v588, 0.0
        %vm633 = vcmp.lt.f32.partialorder %v589, 0.0
        %vm634 = vcmp.lt.f32.partialorder %v590, 0.0
        %vm635 = vcmp.lt.f32.partialorder %v591, 0.0
        %vm636 = vcmp.eq.f32.partialorder %v588, 0.0
        %vm637 = vcmp.eq.f32.partialorder %v589, 0.0
        %vm638 = vcmp.eq.f32.partialorder %v590, 0.0
        %vm639 = vcmp.eq.f32.partialorder %v591, 0.0
        %v640 = vmul.f32 %v628, 0.5
        %v641 = vmul.f32 %v629, 0.5
        %v642 = vmul.f32 %v630, 0.5
        %v643 = vmul.f32 %v631, 0.5
        %v644 = vsel %vm636, %v640, %v628
        %v645 = vsel %vm637, %v641, %v629
        %v646 = vsel %vm638, %v642, %v630
        %v647 = vsel %vm639, %v643, %v631
        %v648 = vsel %vm632, 0.0, %v644
        %v649 = vsel %vm633, 0.0, %v645
        %v650 = vsel %vm634, 0.0, %v646
        %v651 = vsel %vm635, 0.0, %v647
        %v652 = vadd.f32 %v648, %v649
        %v653 = vadd.f32 %v652, %v650
        %v654 = vadd.f32 %v653, %v651
        %v655 = vadd.f32 %v654, 0.0
        %v656 = vld [vmem:[%s250 + $0x20] sm:$0xff]
        %v657 = vld [vmem:[%s250 + $0x28] sm:$0xff]
        %v658 = vld [vmem:[%s250 + $0x30] sm:$0xff]
        %v659 = vld [vmem:[%s250 + $0x38] sm:$0xff]
        %v660 = vld [vmem:[%s256 + $0x20] sm:$0xff]
        %v661 = vld [vmem:[%s256 + $0x28] sm:$0xff]
        %v662 = vld [vmem:[%s256 + $0x30] sm:$0xff]
        %v663 = vld [vmem:[%s256 + $0x38] sm:$0xff]
        %665 = vset.pattern.permute.xlu0 1
        %666 = vperm.xlu0 %665, %v656
        %v667 = vpop.permute.xlu0 %666
        %670 = vset.pattern.permute.xlu0 1
        %671 = vperm.xlu0 %670, %v657
        %v672 = vpop.permute.xlu0 %671
        %675 = vset.pattern.permute.xlu0 1
        %676 = vperm.xlu0 %675, %v658
        %v677 = vpop.permute.xlu0 %676
        %680 = vset.pattern.permute.xlu0 1
        %681 = vperm.xlu0 %680, %v659
        %v682 = vpop.permute.xlu0 %681
        %v684 = vsub.f32 %v667, %v559
        %v685 = vsub.f32 %v672, %v559
        %v686 = vsub.f32 %v677, %v559
        %v687 = vsub.f32 %v682, %v559
        %689 = vset.pattern.permute.xlu0 1
        %690 = vperm.xlu0 %689, %v660
        %v691 = vpop.permute.xlu0 %690
        %694 = vset.pattern.permute.xlu0 1
        %695 = vperm.xlu0 %694, %v661
        %v696 = vpop.permute.xlu0 %695
        %699 = vset.pattern.permute.xlu0 1
        %700 = vperm.xlu0 %699, %v662
        %v701 = vpop.permute.xlu0 %700
        %704 = vset.pattern.permute.xlu0 1
        %705 = vperm.xlu0 %704, %v663
        %v706 = vpop.permute.xlu0 %705
        %v708 = vsub.f32 %v691, %v587
        %v709 = vsub.f32 %v696, %v587
        %v710 = vsub.f32 %v701, %v587
        %v711 = vsub.f32 %v706, %v587
        %v712 = vmul.f32 %v708, 0.2
        %v713 = vmul.f32 %v709, 0.2
        %v714 = vmul.f32 %v710, 0.2
        %v715 = vmul.f32 %v711, 0.2
        %v716 = vsub.f32 %v684, %v712
        %v717 = vsub.f32 %v685, %v713
        %v718 = vsub.f32 %v686, %v714
        %v719 = vsub.f32 %v687, %v715
        %vm720 = vcmp.lt.f32.partialorder %v684, 0.0
        %vm721 = vcmp.lt.f32.partialorder %v685, 0.0
        %vm722 = vcmp.lt.f32.partialorder %v686, 0.0
        %vm723 = vcmp.lt.f32.partialorder %v687, 0.0
        %v724 = vsub.f32 0.0, %v684
        %v725 = vsub.f32 0.0, %v685
        %v726 = vsub.f32 0.0, %v686
        %v727 = vsub.f32 0.0, %v687
        %vm728 = vcmp.lt.f32.partialorder %v716, 0.0
        %vm729 = vcmp.lt.f32.partialorder %v717, 0.0
        %vm730 = vcmp.lt.f32.partialorder %v718, 0.0
        %vm731 = vcmp.lt.f32.partialorder %v719, 0.0
        %v732 = vsub.f32 0.0, %v716
        %v733 = vsub.f32 0.0, %v717
        %v734 = vsub.f32 0.0, %v718
        %v735 = vsub.f32 0.0, %v719
        %v736 = vsub.f32 %v684, %v708
        %v737 = vsub.f32 %v685, %v709
        %v738 = vsub.f32 %v686, %v710
        %v739 = vsub.f32 %v687, %v711
        %v740 = vmax.f32 %v736, 0.0
        %v741 = vmax.f32 %v737, 0.0
        %v742 = vmax.f32 %v738, 0.0
        %v743 = vmax.f32 %v739, 0.0
        %v744 = vsel %vm728, %v732, %v740
        %v745 = vsel %vm729, %v733, %v741
        %v746 = vsel %vm730, %v734, %v742
        %v747 = vsel %vm731, %v735, %v743
        %v748 = vsel %vm720, %v724, %v744
        %v749 = vsel %vm721, %v725, %v745
        %v750 = vsel %vm722, %v726, %v746
        %v751 = vsel %vm723, %v727, %v747
        %vm752 = vcmp.lt.f32.partialorder %v708, 0.0
        %vm753 = vcmp.lt.f32.partialorder %v709, 0.0
        %vm754 = vcmp.lt.f32.partialorder %v710, 0.0
        %vm755 = vcmp.lt.f32.partialorder %v711, 0.0
        %vm756 = vcmp.eq.f32.partialorder %v708, 0.0
        %vm757 = vcmp.eq.f32.partialorder %v709, 0.0
        %vm758 = vcmp.eq.f32.partialorder %v710, 0.0
        %vm759 = vcmp.eq.f32.partialorder %v711, 0.0
        %v760 = vmul.f32 %v748, 0.5
        %v761 = vmul.f32 %v749, 0.5
        %v762 = vmul.f32 %v750, 0.5
        %v763 = vmul.f32 %v751, 0.5
        %v764 = vsel %vm756, %v760, %v748
        %v765 = vsel %vm757, %v761, %v749
        %v766 = vsel %vm758, %v762, %v750
        %v767 = vsel %vm759, %v763, %v751
        %v768 = vsel %vm752, 0.0, %v764
        %v769 = vsel %vm753, 0.0, %v765
        %v770 = vsel %vm754, 0.0, %v766
        %v771 = vsel %vm755, 0.0, %v767
        %v772 = vadd.f32 %v768, %v769
        %v773 = vadd.f32 %v772, %v770
        %v774 = vadd.f32 %v773, %v771
        %v775 = vadd.f32 %v655, %v774
        %v776 = vld [vmem:[%s245 + $0x8] sm:$0xff]
        %v777 = vadd.f32 %v776, %v775
        %778 = vst [vmem:[%s245 + $0x8] sm:$0xff] %v777
        %v779 = vld [vmem:[%s261 + $0x2] sm:$0x1]
        %v780 = vld [vmem:[%s265 + $0x2] sm:$0x1]
        %v781 = vld [vmem:[%s250] sm:$0xff]
        %v782 = vld [vmem:[%s250 + $0x8] sm:$0xff]
        %v783 = vld [vmem:[%s250 + $0x10] sm:$0xff]
        %v784 = vld [vmem:[%s250 + $0x18] sm:$0xff]
        %v785 = vld [vmem:[%s256] sm:$0xff]
        %v786 = vld [vmem:[%s256 + $0x8] sm:$0xff]
        %v787 = vld [vmem:[%s256 + $0x10] sm:$0xff]
        %v788 = vld [vmem:[%s256 + $0x18] sm:$0xff]
        %790 = vset.pattern.permute.xlu0 2
        %791 = vperm.xlu0 %790, %v781
        %v792 = vpop.permute.xlu0 %791
        %795 = vset.pattern.permute.xlu0 2
        %796 = vperm.xlu0 %795, %v782
        %v797 = vpop.permute.xlu0 %796
        %800 = vset.pattern.permute.xlu0 2
        %801 = vperm.xlu0 %800, %v783
        %v802 = vpop.permute.xlu0 %801
        %805 = vset.pattern.permute.xlu0 2
        %806 = vperm.xlu0 %805, %v784
        %v807 = vpop.permute.xlu0 %806
        %v809 = vlaneseq
        %v810 = vshrl.u32 %v809, 7
        %v811 = vsub.s32 0, %v810
        %v812 = vrot.slane %v779, %v811
        %v813 = vsub.f32 %v792, %v812
        %v814 = vsub.f32 %v797, %v812
        %v815 = vsub.f32 %v802, %v812
        %v816 = vsub.f32 %v807, %v812
        %818 = vset.pattern.permute.xlu0 2
        %819 = vperm.xlu0 %818, %v785
        %v820 = vpop.permute.xlu0 %819
        %823 = vset.pattern.permute.xlu0 2
        %824 = vperm.xlu0 %823, %v786
        %v825 = vpop.permute.xlu0 %824
        %828 = vset.pattern.permute.xlu0 2
        %829 = vperm.xlu0 %828, %v787
        %v830 = vpop.permute.xlu0 %829
        %833 = vset.pattern.permute.xlu0 2
        %834 = vperm.xlu0 %833, %v788
        %v835 = vpop.permute.xlu0 %834
        %v837 = vlaneseq
        %v838 = vshrl.u32 %v837, 7
        %v839 = vsub.s32 0, %v838
        %v840 = vrot.slane %v780, %v839
        %v841 = vsub.f32 %v820, %v840
        %v842 = vsub.f32 %v825, %v840
        %v843 = vsub.f32 %v830, %v840
        %v844 = vsub.f32 %v835, %v840
        %v845 = vmul.f32 %v841, 0.2
        %v846 = vmul.f32 %v842, 0.2
        %v847 = vmul.f32 %v843, 0.2
        %v848 = vmul.f32 %v844, 0.2
        %v849 = vsub.f32 %v813, %v845
        %v850 = vsub.f32 %v814, %v846
        %v851 = vsub.f32 %v815, %v847
        %v852 = vsub.f32 %v816, %v848
        %vm853 = vcmp.lt.f32.partialorder %v813, 0.0
        %vm854 = vcmp.lt.f32.partialorder %v814, 0.0
        %vm855 = vcmp.lt.f32.partialorder %v815, 0.0
        %vm856 = vcmp.lt.f32.partialorder %v816, 0.0
        %v857 = vsub.f32 0.0, %v813
        %v858 = vsub.f32 0.0, %v814
        %v859 = vsub.f32 0.0, %v815
        %v860 = vsub.f32 0.0, %v816
        %vm861 = vcmp.lt.f32.partialorder %v849, 0.0
        %vm862 = vcmp.lt.f32.partialorder %v850, 0.0
        %vm863 = vcmp.lt.f32.partialorder %v851, 0.0
        %vm864 = vcmp.lt.f32.partialorder %v852, 0.0
        %v865 = vsub.f32 0.0, %v849
        %v866 = vsub.f32 0.0, %v850
        %v867 = vsub.f32 0.0, %v851
        %v868 = vsub.f32 0.0, %v852
        %v869 = vsub.f32 %v813, %v841
        %v870 = vsub.f32 %v814, %v842
        %v871 = vsub.f32 %v815, %v843
        %v872 = vsub.f32 %v816, %v844
        %v873 = vmax.f32 %v869, 0.0
        %v874 = vmax.f32 %v870, 0.0
        %v875 = vmax.f32 %v871, 0.0
        %v876 = vmax.f32 %v872, 0.0
        %v877 = vsel %vm861, %v865, %v873
        %v878 = vsel %vm862, %v866, %v874
        %v879 = vsel %vm863, %v867, %v875
        %v880 = vsel %vm864, %v868, %v876
        %v881 = vsel %vm853, %v857, %v877
        %v882 = vsel %vm854, %v858, %v878
        %v883 = vsel %vm855, %v859, %v879
        %v884 = vsel %vm856, %v860, %v880
        %vm885 = vcmp.lt.f32.partialorder %v841, 0.0
        %vm886 = vcmp.lt.f32.partialorder %v842, 0.0
        %vm887 = vcmp.lt.f32.partialorder %v843, 0.0
        %vm888 = vcmp.lt.f32.partialorder %v844, 0.0
        %vm889 = vcmp.eq.f32.partialorder %v841, 0.0
        %vm890 = vcmp.eq.f32.partialorder %v842, 0.0
        %vm891 = vcmp.eq.f32.partialorder %v843, 0.0
        %vm892 = vcmp.eq.f32.partialorder %v844, 0.0
        %v893 = vmul.f32 %v881, 0.5
        %v894 = vmul.f32 %v882, 0.5
        %v895 = vmul.f32 %v883, 0.5
        %v896 = vmul.f32 %v884, 0.5
        %v897 = vsel %vm889, %v893, %v881
        %v898 = vsel %vm890, %v894, %v882
        %v899 = vsel %vm891, %v895, %v883
        %v900 = vsel %vm892, %v896, %v884
        %v901 = vsel %vm885, 0.0, %v897
        %v902 = vsel %vm886, 0.0, %v898
        %v903 = vsel %vm887, 0.0, %v899
        %v904 = vsel %vm888, 0.0, %v900
        %v905 = vadd.f32 %v901, %v902
        %v906 = vadd.f32 %v905, %v903
        %v907 = vadd.f32 %v906, %v904
        %v908 = vadd.f32 %v907, 0.0
        %v909 = vld [vmem:[%s250 + $0x20] sm:$0xff]
        %v910 = vld [vmem:[%s250 + $0x28] sm:$0xff]
        %v911 = vld [vmem:[%s250 + $0x30] sm:$0xff]
        %v912 = vld [vmem:[%s250 + $0x38] sm:$0xff]
        %v913 = vld [vmem:[%s256 + $0x20] sm:$0xff]
        %v914 = vld [vmem:[%s256 + $0x28] sm:$0xff]
        %v915 = vld [vmem:[%s256 + $0x30] sm:$0xff]
        %v916 = vld [vmem:[%s256 + $0x38] sm:$0xff]
        %918 = vset.pattern.permute.xlu0 2
        %919 = vperm.xlu0 %918, %v909
        %v920 = vpop.permute.xlu0 %919
        %923 = vset.pattern.permute.xlu0 2
        %924 = vperm.xlu0 %923, %v910
        %v925 = vpop.permute.xlu0 %924
        %928 = vset.pattern.permute.xlu0 2
        %929 = vperm.xlu0 %928, %v911
        %v930 = vpop.permute.xlu0 %929
        %933 = vset.pattern.permute.xlu0 2
        %934 = vperm.xlu0 %933, %v912
        %v935 = vpop.permute.xlu0 %934
        %v937 = vsub.f32 %v920, %v812
        %v938 = vsub.f32 %v925, %v812
        %v939 = vsub.f32 %v930, %v812
        %v940 = vsub.f32 %v935, %v812
        %942 = vset.pattern.permute.xlu0 2
        %943 = vperm.xlu0 %942, %v913
        %v944 = vpop.permute.xlu0 %943
        %947 = vset.pattern.permute.xlu0 2
        %948 = vperm.xlu0 %947, %v914
        %v949 = vpop.permute.xlu0 %948
        %952 = vset.pattern.permute.xlu0 2
        %953 = vperm.xlu0 %952, %v915
        %v954 = vpop.permute.xlu0 %953
        %957 = vset.pattern.permute.xlu0 2
        %958 = vperm.xlu0 %957, %v916
        %v959 = vpop.permute.xlu0 %958
        %v961 = vsub.f32 %v944, %v840
        %v962 = vsub.f32 %v949, %v840
        %v963 = vsub.f32 %v954, %v840
        %v964 = vsub.f32 %v959, %v840
        %v965 = vmul.f32 %v961, 0.2
        %v966 = vmul.f32 %v962, 0.2
        %v967 = vmul.f32 %v963, 0.2
        %v968 = vmul.f32 %v964, 0.2
        %v969 = vsub.f32 %v937, %v965
        %v970 = vsub.f32 %v938, %v966
        %v971 = vsub.f32 %v939, %v967
        %v972 = vsub.f32 %v940, %v968
        %vm973 = vcmp.lt.f32.partialorder %v937, 0.0
        %vm974 = vcmp.lt.f32.partialorder %v938, 0.0
        %vm975 = vcmp.lt.f32.partialorder %v939, 0.0
        %vm976 = vcmp.lt.f32.partialorder %v940, 0.0
        %v977 = vsub.f32 0.0, %v937
        %v978 = vsub.f32 0.0, %v938
        %v979 = vsub.f32 0.0, %v939
        %v980 = vsub.f32 0.0, %v940
        %vm981 = vcmp.lt.f32.partialorder %v969, 0.0
        %vm982 = vcmp.lt.f32.partialorder %v970, 0.0
        %vm983 = vcmp.lt.f32.partialorder %v971, 0.0
        %vm984 = vcmp.lt.f32.partialorder %v972, 0.0
        %v985 = vsub.f32 0.0, %v969
        %v986 = vsub.f32 0.0, %v970
        %v987 = vsub.f32 0.0, %v971
        %v988 = vsub.f32 0.0, %v972
        %v989 = vsub.f32 %v937, %v961
        %v990 = vsub.f32 %v938, %v962
        %v991 = vsub.f32 %v939, %v963
        %v992 = vsub.f32 %v940, %v964
        %v993 = vmax.f32 %v989, 0.0
        %v994 = vmax.f32 %v990, 0.0
        %v995 = vmax.f32 %v991, 0.0
        %v996 = vmax.f32 %v992, 0.0
        %v997 = vsel %vm981, %v985, %v993
        %v998 = vsel %vm982, %v986, %v994
        %v999 = vsel %vm983, %v987, %v995
        %v1000 = vsel %vm984, %v988, %v996
        %v1001 = vsel %vm973, %v977, %v997
        %v1002 = vsel %vm974, %v978, %v998
        %v1003 = vsel %vm975, %v979, %v999
        %v1004 = vsel %vm976, %v980, %v1000
        %vm1005 = vcmp.lt.f32.partialorder %v961, 0.0
        %vm1006 = vcmp.lt.f32.partialorder %v962, 0.0
        %vm1007 = vcmp.lt.f32.partialorder %v963, 0.0
        %vm1008 = vcmp.lt.f32.partialorder %v964, 0.0
        %vm1009 = vcmp.eq.f32.partialorder %v961, 0.0
        %vm1010 = vcmp.eq.f32.partialorder %v962, 0.0
        %vm1011 = vcmp.eq.f32.partialorder %v963, 0.0
        %vm1012 = vcmp.eq.f32.partialorder %v964, 0.0
        %v1013 = vmul.f32 %v1001, 0.5
        %v1014 = vmul.f32 %v1002, 0.5
        %v1015 = vmul.f32 %v1003, 0.5
        %v1016 = vmul.f32 %v1004, 0.5
        %v1017 = vsel %vm1009, %v1013, %v1001
        %v1018 = vsel %vm1010, %v1014, %v1002
        %v1019 = vsel %vm1011, %v1015, %v1003
        %v1020 = vsel %vm1012, %v1016, %v1004
        %v1021 = vsel %vm1005, 0.0, %v1017
        %v1022 = vsel %vm1006, 0.0, %v1018
        %v1023 = vsel %vm1007, 0.0, %v1019
        %v1024 = vsel %vm1008, 0.0, %v1020
        %v1025 = vadd.f32 %v1021, %v1022
        %v1026 = vadd.f32 %v1025, %v1023
        %v1027 = vadd.f32 %v1026, %v1024
        %v1028 = vadd.f32 %v908, %v1027
        %v1029 = vld [vmem:[%s245 + $0x10] sm:$0xff]
        %v1030 = vadd.f32 %v1029, %v1028
        %1031 = vst [vmem:[%s245 + $0x10] sm:$0xff] %v1030
        %s1032 = sand.u32 %s142, 1
        %s1033 = scalar_lea.sflag [#allocation3], %s1032
        %s1034 = sand.u32 %s142, 1
        %s1035 = smul.addr %s1034, 24
        %s1036 = scalar_lea.vmem [#allocation2], %s1035
        // Predicated region
        $region41: #{tpu_custom_call.1} parent=35 // pred_check
          %p1037 = pneg %p152
        $region42: #{tpu_custom_call.1} parent=35 // pred_check_branch
          %1039 = sbr.rel (%p1037) target = $region44
        $region43: #{tpu_custom_call.1} parent=35 // pred_region
          %s1041 = ssub.s32 384, 384
          %1042 = vsyncadd %s1033, %s1041
          %s1043 = smul.addr %s22, 128
          %s1044 = scalar_lea.hbm %s4, %s1043
          %s1045 = sshll.u32 %s1036, 4
          %s1046 = int_to_ptr.vmem [resolvable:$true] %s1045
          %1051 = dma.vmem_to_hbm [thread:$0]  %s1046, 384, %s1044, %s1033, 128, 256, 8
        $region44: #{tpu_custom_call.1} parent=35 // pred_fallthru
          _
      $region36: #{tpu_custom_call.1} parent=5 // pred_fallthru
        _
      %p1052 = scmp.le.s32.totalorder 2, %s13
      // Predicated region
      $region45: #{tpu_custom_call.1} parent=5 // pred_check
        %p1053 = pneg %p1052
      $region46: #{tpu_custom_call.1} parent=5 // pred_check_branch
        %1055 = sbr.rel (%p1053) target = $region48
      $region47: #{tpu_custom_call.1} parent=5 // pred_region
        %s1056 = ssub.s32 %s13, 2
        // Predicated region
        $region49: #{tpu_custom_call.1} parent=47 // pred_check
          %p1057 = pneg %p158
        $region50: #{tpu_custom_call.1} parent=47 // pred_check_branch
          %1059 = sbr.rel (%p1057) target = $region52
        $region51: #{tpu_custom_call.1} parent=47 // pred_region
          %s1060 = sand.u32 %s143, 1
          %s1061 = scalar_lea.sflag [#allocation3], %s1060
          %s1062 = sand.u32 %s143, 1
          %s1063 = smul.addr %s1062, 24
          %s1064 = scalar_lea.vmem [#allocation2], %s1063
          %1065 = dma.done %s1061, 384
        $region52: #{tpu_custom_call.1} parent=47 // pred_fallthru
          _
      $region48: #{tpu_custom_call.1} parent=5 // pred_fallthru
        _
    $region6: #{tpu_custom_call.1} parent=1 // loop_footer
      %s17 = sadd.s32 1, %s13
    $region7: #{tpu_custom_call.1} parent=1 // loop_footer_branch
      %12 = sbr.rel target = $region3
    $region8: #{tpu_custom_call.1} parent=1 // loop_exit
      _
    %1066 = vsyncpa [#allocation3], 1
    %s1067 = scalar_lea.sflag [#allocation3], 1
    %1068 = vsyncpa %s1067, 1

</llo_original>
